<compile_context>
chip_gen: v5e
topology: v5e:2x2
jax: 0.10.0
libtpu: 0.0.40
codegen_flags: <defaults>
</compile_context>

<pallas_src>
import functools
import math

import jax
import jax.numpy as jnp
from jax.experimental import pallas as pl
from jax.experimental.pallas import tpu as pltpu


def temporal_attention_kernel(x_ref, te_ref, blockeq_ref, timesel_ref, bias_ref,
                              wqkv_ref, bqkv_ref, wo_ref, bo_ref,
                              w1_ref, b1_ref, w2_ref, b2_ref,
                              out_ref, ctx_ref, *, heads, dims):
    x = x_ref[0] + te_ref[0]                       # (F, L) lane-dense; x += te
    Fdim, L = x.shape
    T = timesel_ref.shape[0]                       # time steps per block

    def linear(z, w_ref, b_ref):
        # (F_out, F_in) @ (F_in, L) + (F_out, 1)
        return jnp.dot(w_ref[...], z, preferred_element_type=jnp.float32) + b_ref[...]

    # Fused QKV projection; Q rows are pre-scaled by 1/sqrt(dims).
    qkv = linear(x, wqkv_ref, bqkv_ref)            # (3F, L)
    q = qkv[:Fdim]
    k = qkv[Fdim:2 * Fdim]
    v = qkv[2 * Fdim:]

    blockeq = blockeq_ref[...]                     # (L, L) 1.0 iff same (batch, vertex) block
    timesel = timesel_ref[...]                     # (T, L) 1.0 iff lane's time index == s
    bias = bias_ref[...]                           # (T, L) 0 / -1e9 causal band bias

    # Gather every block's K / V rows onto that block's own lanes with one MXU
    # matmul each (contraction over L, MXU is otherwise idle here):
    #   kall[f, s, r] = k[f, blk(r)*T + s],  vall[s, f, r] = v[f, blk(r)*T + s]
    kmask = k[:, None, :] * timesel[None, :, :]                       # (F, T, L)
    kall = jax.lax.dot_general(kmask.reshape(Fdim * T, L), blockeq,
                               (((1,), (0,)), ((), ())),
                               preferred_element_type=jnp.float32).reshape(Fdim, T, L)
    vmask = v[None, :, :] * timesel[:, None, :]                       # (T, F, L)
    vall = jax.lax.dot_general(vmask.reshape(T * Fdim, L), blockeq,
                               (((1,), (0,)), ((), ())),
                               preferred_element_type=jnp.float32).reshape(T, Fdim, L)

    # Per-head band attention: scores/softmax only touch the (T, L) valid band.
    for h in range(heads):                          # tiny body; ctx goes to scratch slice
        lo, hi = h * dims, (h + 1) * dims
        q_h = q[lo:hi]                              # (d, L)
        # w[s, r] = sum_d q_h[d, r] * k_h[d, blk(r)*T + s]   (already scaled)
        w = jnp.sum(kall[lo:hi] * q_h[:, None, :], axis=0) + bias     # (T, L)
        m = jnp.max(w, axis=0, keepdims=True)       # exact per-(block, query) max
        e = jnp.exp(w - m)                          # 1 vreg of EUP work per head
        p = e * pl.reciprocal(jnp.sum(e, axis=0, keepdims=True), approx=True)
        # ctx[d, r] = sum_s p[s, r] * v_h[d, blk(r)*T + s]
        ctx_ref[lo:hi, :] = jnp.sum(vall[:, lo:hi, :] * p[:, None, :], axis=0)

    o = linear(ctx_ref[...], wo_ref, bo_ref) + x    # ofc + residual (x already has te)

    def layer_norm(z):                              # LayerNorm over features (axis 0)
        mu = jnp.mean(z, axis=0, keepdims=True)
        var = jnp.mean((z - mu) ** 2, axis=0, keepdims=True)
        return (z - mu) * jax.lax.rsqrt(var + 1e-5)

    o = layer_norm(o)
    f = jnp.maximum(linear(o, w1_ref, b1_ref), 0.0)           # FeedForward: Linear -> ReLU
    out_ref[0] = layer_norm(linear(f, w2_ref, b2_ref) + o)    # -> Linear, residual, LN


def _default_batch_block(batch):
    """Fold all batches into lanes on single-TensorCore chips (v5e/v6e);
    keep one batch per grid step elsewhere (v7x: one batch per core)."""
    try:
        kind = jax.devices()[0].device_kind.lower()
    except Exception:
        return 1
    if any(tag in kind for tag in ("v5e", "v5 lite", "v5litepod", "v6e", "v6 lite")):
        return batch
    return 1


def temporal_attention(x, te, params, heads, dims, batch_block=None):
    B, T, N, F = x.shape
    if batch_block is None:
        batch_block = _default_batch_block(B)
    assert B % batch_block == 0
    G = B // batch_block               # grid steps
    L = batch_block * N * T            # lanes per grid step (vertex-major, time-minor)

    wq, bq, wk, bk, wv, bv, wo, bo, w1, b1, w2, b2 = params
    scale = jnp.float32(1.0 / math.sqrt(dims))

    # Transposed weights (F_out, F_in) so the kernel computes W @ x_fr.
    # Q/K/V fused; 1/sqrt(dims) folded into the Q weights/bias.
    wqkv = jnp.concatenate([wq.T * scale, wk.T, wv.T], axis=0)            # (3F, F)
    bqkv = jnp.concatenate([bq * scale, bk, bv], axis=0).reshape(3 * F, 1)

    # Attention-structure constants, hoisted out of the kernel (stay resident).
    lane = jnp.arange(L, dtype=jnp.int32)
    blk = lane // T
    s_idx = jnp.arange(T, dtype=jnp.int32)
    blockeq = (blk[:, None] == blk[None, :]).astype(jnp.float32)          # (L, L)
    timesel = ((lane[None, :] % T) == s_idx[:, None]).astype(jnp.float32)  # (T, L)
    causal_bias = jnp.where(s_idx[:, None] <= (lane[None, :] % T),
                            0.0, -1e9).astype(jnp.float32)                # (T, L)

    const_args = (blockeq, timesel, causal_bias,
                  wqkv, bqkv,
                  wo.T, bo.reshape(F, 1),
                  w1.T, b1.reshape(F, 1),
                  w2.T, b2.reshape(F, 1))

    # Lane-dense activations: (G, F, L), lane index = (b_in_block*N + n)*T + t.
    def to_lane_major(a):
        a = jnp.transpose(a, (0, 3, 2, 1))                    # (B, F, N, T)
        a = a.reshape(G, batch_block, F, N, T)
        a = jnp.transpose(a, (0, 2, 1, 3, 4))                 # (G, F, bb, N, T)
        return a.reshape(G, F, L)

    def from_lane_major(a):
        a = a.reshape(G, F, batch_block, N, T)
        a = jnp.transpose(a, (0, 2, 1, 3, 4))                 # (G, bb, F, N, T)
        a = a.reshape(B, F, N, T)
        return jnp.transpose(a, (0, 3, 2, 1))                 # (B, T, N, F)

    x_fr = to_lane_major(x)
    te_fr = to_lane_major(te)

    aspec = pl.BlockSpec((1, F, L), lambda g: (g, 0, 0))

    def const_spec(a):
        return pl.BlockSpec(a.shape, lambda g: (0, 0))        # resident after step 0

    kernel = functools.partial(temporal_attention_kernel, heads=heads, dims=dims)
    out_fr = pl.pallas_call(
        kernel,
        out_shape=jax.ShapeDtypeStruct((G, F, L), jnp.float32),
        grid_spec=pltpu.PrefetchScalarGridSpec(
            num_scalar_prefetch=0,
            grid=(G,),
            in_specs=[aspec, aspec] + [const_spec(a) for a in const_args],
            out_specs=aspec,
            scratch_shapes=[pltpu.VMEM((F, L), jnp.float32)],
        ),
        compiler_params=pltpu.CompilerParams(
            dimension_semantics=("parallel",),
            vmem_limit_bytes=32 * 1024 * 1024,
        ),
    )(x_fr, te_fr, *const_args)

    return from_lane_major(out_fr)


def reference(x, te, params, heads, dims):
    """Pure-JAX transcription of the PyTorch forward (for verification)."""
    wq, bq, wk, bk, wv, bv, wo, bo, w1, b1, w2, b2 = params
    B, T, N, F = x.shape

    def lin(z, w, b):
        return z @ w + b

    def ln(z):
        mu = jnp.mean(z, axis=-1, keepdims=True)
        var = jnp.mean((z - mu) ** 2, axis=-1, keepdims=True)
        return (z - mu) * jax.lax.rsqrt(var + 1e-5)

    x = x + te
    q = lin(x, wq, bq)
    k = lin(x, wk, bk)
    v = lin(x, wv, bv)
    q = jnp.concatenate(jnp.split(q, heads, axis=-1), axis=0)   # (hB, T, N, d)
    k = jnp.concatenate(jnp.split(k, heads, axis=-1), axis=0)
    v = jnp.concatenate(jnp.split(v, heads, axis=-1), axis=0)
    q = jnp.transpose(q, (0, 2, 1, 3))                          # (hB, N, T, d)
    k = jnp.transpose(k, (0, 2, 3, 1))                          # (hB, N, d, T)
    v = jnp.transpose(v, (0, 2, 1, 3))
    att = jnp.matmul(q, k) / math.sqrt(dims)                    # (hB, N, T, T)
    mask = jnp.tril(jnp.ones((T, T), dtype=bool))
    att = jnp.where(mask[None, None], att, jnp.float32(-(2 ** 15) + 1))
    att = jax.nn.softmax(att, axis=-1)
    val = jnp.matmul(att, v)                                    # (hB, N, T, d)
    val = jnp.concatenate(jnp.split(val, heads, axis=0), axis=-1)  # (B, N, T, F)
    val = jnp.transpose(val, (0, 2, 1, 3))                      # (B, T, N, F)
    val = lin(val, wo, bo) + x
    val = ln(val)
    f = lin(jax.nn.relu(lin(val, w1, b1)), w2, b2) + val
    return ln(f)


if __name__ == "__main__":
    B, T, N = 2, 8, 16
    heads, dims = 4, 8
    F = heads * dims

    key = jax.random.PRNGKey(0)
    ks = jax.random.split(key, 14)
    s = 1.0 / math.sqrt(F)

    def u(k, shape):
        return jax.random.uniform(k, shape, jnp.float32, -s, s)

    params = (u(ks[0], (F, F)), u(ks[1], (F,)),
              u(ks[2], (F, F)), u(ks[3], (F,)),
              u(ks[4], (F, F)), u(ks[5], (F,)),
              u(ks[6], (F, F)), u(ks[7], (F,)),
              u(ks[8], (F, F)), u(ks[9], (F,)),
              u(ks[10], (F, F)), u(ks[11], (F,)))

    x = jax.random.normal(ks[12], (B, T, N, F), jnp.float32)
    te = jax.random.normal(ks[13], (B, T, N, F), jnp.float32)

    ref = reference(x, te, params, heads, dims)

    # Exercise both grid shapes: one batch per grid step (v7x: one per core)
    # and all batches folded into the lane dimension (v5e/v6e single-core),
    # plus the auto-detected default.  Tolerance is slightly looser than
    # exact f32 because of the approximate EUP reciprocal in the softmax.
    for bb in (1, B, None):
        out = jax.block_until_ready(
            temporal_attention(x, te, params, heads, dims, batch_block=bb))
        assert out.shape == (B, T, N, F)
        err = float(jnp.max(jnp.abs(out - ref)))
        assert jnp.allclose(out, ref, atol=2e-3, rtol=2e-3), \
            f"batch_block={bb}: max abs err {err}"
    print("KERNEL_OK")
</pallas_src>

<mosaic_0001>
module attributes {stable_mosaic.version = 11 : i64} {
  func.func @temporal_attention_kernel(%arg0: i32, %arg1: memref<1x32x128xf32, #tpu.memory_space<vmem>>, %arg2: memref<1x32x128xf32, #tpu.memory_space<vmem>>, %arg3: memref<128x128xf32, #tpu.memory_space<vmem>>, %arg4: memref<8x128xf32, #tpu.memory_space<vmem>>, %arg5: memref<8x128xf32, #tpu.memory_space<vmem>>, %arg6: memref<96x32xf32, #tpu.memory_space<vmem>>, %arg7: memref<96x1xf32, #tpu.memory_space<vmem>>, %arg8: memref<32x32xf32, #tpu.memory_space<vmem>>, %arg9: memref<32x1xf32, #tpu.memory_space<vmem>>, %arg10: memref<32x32xf32, #tpu.memory_space<vmem>>, %arg11: memref<32x1xf32, #tpu.memory_space<vmem>>, %arg12: memref<32x32xf32, #tpu.memory_space<vmem>>, %arg13: memref<32x1xf32, #tpu.memory_space<vmem>>, %arg14: memref<1x32x128xf32, #tpu.memory_space<vmem>>, %arg15: memref<32x128xf32, #tpu.memory_space<vmem>>) attributes {dimension_semantics = [#tpu.dimension_semantics<parallel>], iteration_bounds = array<i64: 2>, scalar_prefetch = 0 : i64, scratch_operands = 1 : i64, tpu.core_type = #tpu.core_type<tc>, window_params = [{transform_indices = @transform_0, window_bounds = array<i64: 1, 32, 128>}, {transform_indices = @transform_1, window_bounds = array<i64: 1, 32, 128>}, {pipeline_mode = #tpu.pipeline_mode<synchronous>, transform_indices = @transform_2, window_bounds = array<i64: 128, 128>}, {pipeline_mode = #tpu.pipeline_mode<synchronous>, transform_indices = @transform_3, window_bounds = array<i64: 8, 128>}, {pipeline_mode = #tpu.pipeline_mode<synchronous>, transform_indices = @transform_4, window_bounds = array<i64: 8, 128>}, {pipeline_mode = #tpu.pipeline_mode<synchronous>, transform_indices = @transform_5, window_bounds = array<i64: 96, 32>}, {pipeline_mode = #tpu.pipeline_mode<synchronous>, transform_indices = @transform_6, window_bounds = array<i64: 96, 1>}, {pipeline_mode = #tpu.pipeline_mode<synchronous>, transform_indices = @transform_7, window_bounds = array<i64: 32, 32>}, {pipeline_mode = #tpu.pipeline_mode<synchronous>, transform_indices = @transform_8, window_bounds = array<i64: 32, 1>}, {pipeline_mode = #tpu.pipeline_mode<synchronous>, transform_indices = @transform_9, window_bounds = array<i64: 32, 32>}, {pipeline_mode = #tpu.pipeline_mode<synchronous>, transform_indices = @transform_10, window_bounds = array<i64: 32, 1>}, {pipeline_mode = #tpu.pipeline_mode<synchronous>, transform_indices = @transform_11, window_bounds = array<i64: 32, 32>}, {pipeline_mode = #tpu.pipeline_mode<synchronous>, transform_indices = @transform_12, window_bounds = array<i64: 32, 1>}, {transform_indices = @transform_13, window_bounds = array<i64: 1, 32, 128>}]} {
    %c0 = arith.constant 0 : index
    %c0_0 = arith.constant 0 : index
    %c0_1 = arith.constant 0 : index
    %0 = vector.load %arg1[%c0, %c0_0, %c0_1] : memref<1x32x128xf32, #tpu.memory_space<vmem>>, vector<1x32x128xf32>
    %1 = vector.shape_cast %0 : vector<1x32x128xf32> to vector<32x128xf32>
    %c0_2 = arith.constant 0 : index
    %c0_3 = arith.constant 0 : index
    %c0_4 = arith.constant 0 : index
    %2 = vector.load %arg2[%c0_2, %c0_3, %c0_4] : memref<1x32x128xf32, #tpu.memory_space<vmem>>, vector<1x32x128xf32>
    %3 = vector.shape_cast %2 : vector<1x32x128xf32> to vector<32x128xf32>
    %4 = arith.addf %1, %3 : vector<32x128xf32>
    %c0_5 = arith.constant 0 : index
    %c0_6 = arith.constant 0 : index
    %5 = vector.load %arg6[%c0_5, %c0_6] : memref<96x32xf32, #tpu.memory_space<vmem>>, vector<96x32xf32>
    %cst = arith.constant dense<0.000000e+00> : vector<96x128xf32>
    %6 = tpu.matmul %5, %4, %cst {dimension_numbers = #tpu.dot_dimension_numbers<[1], [0], [0], [1], [0, 0, 1, 1], [], []>} : vector<96x32xf32>, vector<32x128xf32>, vector<96x128xf32> -> vector<96x128xf32>
    %c0_7 = arith.constant 0 : index
    %c0_8 = arith.constant 0 : index
    %7 = vector.load %arg7[%c0_7, %c0_8] : memref<96x1xf32, #tpu.memory_space<vmem>>, vector<96x1xf32>
    %8 = vector.broadcast %7 : vector<96x1xf32> to vector<96x128xf32>
    %9 = arith.addf %6, %8 : vector<96x128xf32>
    %10 = vector.extract_strided_slice %9 {offsets = [0, 0], sizes = [32, 128], strides = [1, 1]} : vector<96x128xf32> to vector<32x128xf32>
    %11 = vector.extract_strided_slice %9 {offsets = [32, 0], sizes = [32, 128], strides = [1, 1]} : vector<96x128xf32> to vector<32x128xf32>
    %12 = vector.extract_strided_slice %9 {offsets = [64, 0], sizes = [32, 128], strides = [1, 1]} : vector<96x128xf32> to vector<32x128xf32>
    %c0_9 = arith.constant 0 : index
    %c0_10 = arith.constant 0 : index
    %13 = vector.load %arg3[%c0_9, %c0_10] : memref<128x128xf32, #tpu.memory_space<vmem>>, vector<128x128xf32>
    %c0_11 = arith.constant 0 : index
    %c0_12 = arith.constant 0 : index
    %14 = vector.load %arg4[%c0_11, %c0_12] : memref<8x128xf32, #tpu.memory_space<vmem>>, vector<8x128xf32>
    %c0_13 = arith.constant 0 : index
    %c0_14 = arith.constant 0 : index
    %15 = vector.load %arg5[%c0_13, %c0_14] : memref<8x128xf32, #tpu.memory_space<vmem>>, vector<8x128xf32>
    %16 = vector.shape_cast %11 : vector<32x128xf32> to vector<32x1x128xf32>
    %17 = vector.shape_cast %14 : vector<8x128xf32> to vector<1x8x128xf32>
    %18 = vector.broadcast %16 : vector<32x1x128xf32> to vector<32x8x128xf32>
    %19 = vector.broadcast %17 : vector<1x8x128xf32> to vector<32x8x128xf32>
    %20 = arith.mulf %18, %19 : vector<32x8x128xf32>
    %21 = vector.shape_cast %20 : vector<32x8x128xf32> to vector<256x128xf32>
    %cst_15 = arith.constant dense<0.000000e+00> : vector<256x128xf32>
    %22 = tpu.matmul %21, %13, %cst_15 {dimension_numbers = #tpu.dot_dimension_numbers<[1], [0], [0], [1], [0, 0, 1, 1], [], []>} : vector<256x128xf32>, vector<128x128xf32>, vector<256x128xf32> -> vector<256x128xf32>
    %23 = vector.shape_cast %22 : vector<256x128xf32> to vector<32x8x128xf32>
    %24 = vector.shape_cast %12 : vector<32x128xf32> to vector<1x32x128xf32>
    %25 = vector.shape_cast %14 : vector<8x128xf32> to vector<8x1x128xf32>
    %26 = vector.broadcast %24 : vector<1x32x128xf32> to vector<8x32x128xf32>
    %27 = vector.broadcast %25 : vector<8x1x128xf32> to vector<8x32x128xf32>
    %28 = arith.mulf %26, %27 : vector<8x32x128xf32>
    %29 = vector.shape_cast %28 : vector<8x32x128xf32> to vector<256x128xf32>
    %cst_16 = arith.constant dense<0.000000e+00> : vector<256x128xf32>
    %30 = tpu.matmul %29, %13, %cst_16 {dimension_numbers = #tpu.dot_dimension_numbers<[1], [0], [0], [1], [0, 0, 1, 1], [], []>} : vector<256x128xf32>, vector<128x128xf32>, vector<256x128xf32> -> vector<256x128xf32>
    %31 = vector.shape_cast %30 : vector<256x128xf32> to vector<8x32x128xf32>
    %32 = vector.extract_strided_slice %10 {offsets = [0, 0], sizes = [8, 128], strides = [1, 1]} : vector<32x128xf32> to vector<8x128xf32>
    %33 = vector.extract_strided_slice %23 {offsets = [0, 0, 0], sizes = [8, 8, 128], strides = [1, 1, 1]} : vector<32x8x128xf32> to vector<8x8x128xf32>
    %34 = vector.shape_cast %32 : vector<8x128xf32> to vector<8x1x128xf32>
    %35 = vector.broadcast %34 : vector<8x1x128xf32> to vector<8x8x128xf32>
    %36 = arith.mulf %33, %35 : vector<8x8x128xf32>
    %cst_17 = arith.constant dense<0.000000e+00> : vector<8x128xf32>
    %37 = vector.multi_reduction <add>, %36, %cst_17 [0] : vector<8x8x128xf32> to vector<8x128xf32>
    %38 = arith.addf %37, %15 : vector<8x128xf32>
    %cst_18 = arith.constant dense<0xFF800000> : vector<128xf32>
    %39 = vector.multi_reduction <maximumf>, %38, %cst_18 [0] : vector<8x128xf32> to vector<128xf32>
    %40 = vector.shape_cast %39 : vector<128xf32> to vector<1x128xf32>
    %41 = vector.broadcast %40 : vector<1x128xf32> to vector<8x128xf32>
    %42 = arith.subf %38, %41 : vector<8x128xf32>
    %43 = math.exp %42 : vector<8x128xf32>
    %cst_19 = arith.constant dense<0.000000e+00> : vector<128xf32>
    %44 = vector.multi_reduction <add>, %43, %cst_19 [0] : vector<8x128xf32> to vector<128xf32>
    %45 = vector.shape_cast %44 : vector<128xf32> to vector<1x128xf32>
    %46 = tpu.reciprocal %45 {approx = true} : vector<1x128xf32> -> vector<1x128xf32>
    %47 = vector.broadcast %46 : vector<1x128xf32> to vector<8x128xf32>
    %48 = arith.mulf %43, %47 : vector<8x128xf32>
    %49 = vector.extract_strided_slice %31 {offsets = [0, 0, 0], sizes = [8, 8, 128], strides = [1, 1, 1]} : vector<8x32x128xf32> to vector<8x8x128xf32>
    %50 = vector.shape_cast %48 : vector<8x128xf32> to vector<8x1x128xf32>
    %51 = vector.broadcast %50 : vector<8x1x128xf32> to vector<8x8x128xf32>
    %52 = arith.mulf %49, %51 : vector<8x8x128xf32>
    %cst_20 = arith.constant dense<0.000000e+00> : vector<8x128xf32>
    %53 = vector.multi_reduction <add>, %52, %cst_20 [0] : vector<8x8x128xf32> to vector<8x128xf32>
    %c0_21 = arith.constant 0 : index
    %c0_22 = arith.constant 0 : index
    %54 = vector.load %arg15[%c0_21, %c0_22] : memref<32x128xf32, #tpu.memory_space<vmem>>, vector<8x128xf32>
    tpu.vector_store %arg15[%c0_21, %c0_22], %53 {strides = array<i32>} : memref<32x128xf32, #tpu.memory_space<vmem>>, vector<8x128xf32>,
    %55 = vector.extract_strided_slice %10 {offsets = [8, 0], sizes = [8, 128], strides = [1, 1]} : vector<32x128xf32> to vector<8x128xf32>
    %56 = vector.extract_strided_slice %23 {offsets = [8, 0, 0], sizes = [8, 8, 128], strides = [1, 1, 1]} : vector<32x8x128xf32> to vector<8x8x128xf32>
    %57 = vector.shape_cast %55 : vector<8x128xf32> to vector<8x1x128xf32>
    %58 = vector.broadcast %57 : vector<8x1x128xf32> to vector<8x8x128xf32>
    %59 = arith.mulf %56, %58 : vector<8x8x128xf32>
    %cst_23 = arith.constant dense<0.000000e+00> : vector<8x128xf32>
    %60 = vector.multi_reduction <add>, %59, %cst_23 [0] : vector<8x8x128xf32> to vector<8x128xf32>
    %61 = arith.addf %60, %15 : vector<8x128xf32>
    %cst_24 = arith.constant dense<0xFF800000> : vector<128xf32>
    %62 = vector.multi_reduction <maximumf>, %61, %cst_24 [0] : vector<8x128xf32> to vector<128xf32>
    %63 = vector.shape_cast %62 : vector<128xf32> to vector<1x128xf32>
    %64 = vector.broadcast %63 : vector<1x128xf32> to vector<8x128xf32>
    %65 = arith.subf %61, %64 : vector<8x128xf32>
    %66 = math.exp %65 : vector<8x128xf32>
    %cst_25 = arith.constant dense<0.000000e+00> : vector<128xf32>
    %67 = vector.multi_reduction <add>, %66, %cst_25 [0] : vector<8x128xf32> to vector<128xf32>
    %68 = vector.shape_cast %67 : vector<128xf32> to vector<1x128xf32>
    %69 = tpu.reciprocal %68 {approx = true} : vector<1x128xf32> -> vector<1x128xf32>
    %70 = vector.broadcast %69 : vector<1x128xf32> to vector<8x128xf32>
    %71 = arith.mulf %66, %70 : vector<8x128xf32>
    %72 = vector.extract_strided_slice %31 {offsets = [0, 8, 0], sizes = [8, 8, 128], strides = [1, 1, 1]} : vector<8x32x128xf32> to vector<8x8x128xf32>
    %73 = vector.shape_cast %71 : vector<8x128xf32> to vector<8x1x128xf32>
    %74 = vector.broadcast %73 : vector<8x1x128xf32> to vector<8x8x128xf32>
    %75 = arith.mulf %72, %74 : vector<8x8x128xf32>
    %cst_26 = arith.constant dense<0.000000e+00> : vector<8x128xf32>
    %76 = vector.multi_reduction <add>, %75, %cst_26 [0] : vector<8x8x128xf32> to vector<8x128xf32>
    %c8 = arith.constant 8 : index
    %c0_27 = arith.constant 0 : index
    %77 = vector.load %arg15[%c8, %c0_27] : memref<32x128xf32, #tpu.memory_space<vmem>>, vector<8x128xf32>
    tpu.vector_store %arg15[%c8, %c0_27], %76 {strides = array<i32>} : memref<32x128xf32, #tpu.memory_space<vmem>>, vector<8x128xf32>,
    %78 = vector.extract_strided_slice %10 {offsets = [16, 0], sizes = [8, 128], strides = [1, 1]} : vector<32x128xf32> to vector<8x128xf32>
    %79 = vector.extract_strided_slice %23 {offsets = [16, 0, 0], sizes = [8, 8, 128], strides = [1, 1, 1]} : vector<32x8x128xf32> to vector<8x8x128xf32>
    %80 = vector.shape_cast %78 : vector<8x128xf32> to vector<8x1x128xf32>
    %81 = vector.broadcast %80 : vector<8x1x128xf32> to vector<8x8x128xf32>
    %82 = arith.mulf %79, %81 : vector<8x8x128xf32>
    %cst_28 = arith.constant dense<0.000000e+00> : vector<8x128xf32>
    %83 = vector.multi_reduction <add>, %82, %cst_28 [0] : vector<8x8x128xf32> to vector<8x128xf32>
    %84 = arith.addf %83, %15 : vector<8x128xf32>
    %cst_29 = arith.constant dense<0xFF800000> : vector<128xf32>
    %85 = vector.multi_reduction <maximumf>, %84, %cst_29 [0] : vector<8x128xf32> to vector<128xf32>
    %86 = vector.shape_cast %85 : vector<128xf32> to vector<1x128xf32>
    %87 = vector.broadcast %86 : vector<1x128xf32> to vector<8x128xf32>
    %88 = arith.subf %84, %87 : vector<8x128xf32>
    %89 = math.exp %88 : vector<8x128xf32>
    %cst_30 = arith.constant dense<0.000000e+00> : vector<128xf32>
    %90 = vector.multi_reduction <add>, %89, %cst_30 [0] : vector<8x128xf32> to vector<128xf32>
    %91 = vector.shape_cast %90 : vector<128xf32> to vector<1x128xf32>
    %92 = tpu.reciprocal %91 {approx = true} : vector<1x128xf32> -> vector<1x128xf32>
    %93 = vector.broadcast %92 : vector<1x128xf32> to vector<8x128xf32>
    %94 = arith.mulf %89, %93 : vector<8x128xf32>
    %95 = vector.extract_strided_slice %31 {offsets = [0, 16, 0], sizes = [8, 8, 128], strides = [1, 1, 1]} : vector<8x32x128xf32> to vector<8x8x128xf32>
    %96 = vector.shape_cast %94 : vector<8x128xf32> to vector<8x1x128xf32>
    %97 = vector.broadcast %96 : vector<8x1x128xf32> to vector<8x8x128xf32>
    %98 = arith.mulf %95, %97 : vector<8x8x128xf32>
    %cst_31 = arith.constant dense<0.000000e+00> : vector<8x128xf32>
    %99 = vector.multi_reduction <add>, %98, %cst_31 [0] : vector<8x8x128xf32> to vector<8x128xf32>
    %c16 = arith.constant 16 : index
    %c0_32 = arith.constant 0 : index
    %100 = vector.load %arg15[%c16, %c0_32] : memref<32x128xf32, #tpu.memory_space<vmem>>, vector<8x128xf32>
    tpu.vector_store %arg15[%c16, %c0_32], %99 {strides = array<i32>} : memref<32x128xf32, #tpu.memory_space<vmem>>, vector<8x128xf32>,
    %101 = vector.extract_strided_slice %10 {offsets = [24, 0], sizes = [8, 128], strides = [1, 1]} : vector<32x128xf32> to vector<8x128xf32>
    %102 = vector.extract_strided_slice %23 {offsets = [24, 0, 0], sizes = [8, 8, 128], strides = [1, 1, 1]} : vector<32x8x128xf32> to vector<8x8x128xf32>
    %103 = vector.shape_cast %101 : vector<8x128xf32> to vector<8x1x128xf32>
    %104 = vector.broadcast %103 : vector<8x1x128xf32> to vector<8x8x128xf32>
    %105 = arith.mulf %102, %104 : vector<8x8x128xf32>
    %cst_33 = arith.constant dense<0.000000e+00> : vector<8x128xf32>
    %106 = vector.multi_reduction <add>, %105, %cst_33 [0] : vector<8x8x128xf32> to vector<8x128xf32>
    %107 = arith.addf %106, %15 : vector<8x128xf32>
    %cst_34 = arith.constant dense<0xFF800000> : vector<128xf32>
    %108 = vector.multi_reduction <maximumf>, %107, %cst_34 [0] : vector<8x128xf32> to vector<128xf32>
    %109 = vector.shape_cast %108 : vector<128xf32> to vector<1x128xf32>
    %110 = vector.broadcast %109 : vector<1x128xf32> to vector<8x128xf32>
    %111 = arith.subf %107, %110 : vector<8x128xf32>
    %112 = math.exp %111 : vector<8x128xf32>
    %cst_35 = arith.constant dense<0.000000e+00> : vector<128xf32>
    %113 = vector.multi_reduction <add>, %112, %cst_35 [0] : vector<8x128xf32> to vector<128xf32>
    %114 = vector.shape_cast %113 : vector<128xf32> to vector<1x128xf32>
    %115 = tpu.reciprocal %114 {approx = true} : vector<1x128xf32> -> vector<1x128xf32>
    %116 = vector.broadcast %115 : vector<1x128xf32> to vector<8x128xf32>
    %117 = arith.mulf %112, %116 : vector<8x128xf32>
    %118 = vector.extract_strided_slice %31 {offsets = [0, 24, 0], sizes = [8, 8, 128], strides = [1, 1, 1]} : vector<8x32x128xf32> to vector<8x8x128xf32>
    %119 = vector.shape_cast %117 : vector<8x128xf32> to vector<8x1x128xf32>
    %120 = vector.broadcast %119 : vector<8x1x128xf32> to vector<8x8x128xf32>
    %121 = arith.mulf %118, %120 : vector<8x8x128xf32>
    %cst_36 = arith.constant dense<0.000000e+00> : vector<8x128xf32>
    %122 = vector.multi_reduction <add>, %121, %cst_36 [0] : vector<8x8x128xf32> to vector<8x128xf32>
    %c24 = arith.constant 24 : index
    %c0_37 = arith.constant 0 : index
    %123 = vector.load %arg15[%c24, %c0_37] : memref<32x128xf32, #tpu.memory_space<vmem>>, vector<8x128xf32>
    tpu.vector_store %arg15[%c24, %c0_37], %122 {strides = array<i32>} : memref<32x128xf32, #tpu.memory_space<vmem>>, vector<8x128xf32>,
    %c0_38 = arith.constant 0 : index
    %c0_39 = arith.constant 0 : index
    %124 = vector.load %arg15[%c0_38, %c0_39] : memref<32x128xf32, #tpu.memory_space<vmem>>, vector<32x128xf32>
    %c0_40 = arith.constant 0 : index
    %c0_41 = arith.constant 0 : index
    %125 = vector.load %arg8[%c0_40, %c0_41] : memref<32x32xf32, #tpu.memory_space<vmem>>, vector<32x32xf32>
    %cst_42 = arith.constant dense<0.000000e+00> : vector<32x128xf32>
    %126 = tpu.matmul %125, %124, %cst_42 {dimension_numbers = #tpu.dot_dimension_numbers<[1], [0], [0], [1], [0, 0, 1, 1], [], []>} : vector<32x32xf32>, vector<32x128xf32>, vector<32x128xf32> -> vector<32x128xf32>
    %c0_43 = arith.constant 0 : index
    %c0_44 = arith.constant 0 : index
    %127 = vector.load %arg9[%c0_43, %c0_44] : memref<32x1xf32, #tpu.memory_space<vmem>>, vector<32x1xf32>
    %128 = vector.broadcast %127 : vector<32x1xf32> to vector<32x128xf32>
    %129 = arith.addf %126, %128 : vector<32x128xf32>
    %130 = arith.addf %129, %4 : vector<32x128xf32>
    %cst_45 = arith.constant dense<0.000000e+00> : vector<128xf32>
    %131 = vector.multi_reduction <add>, %130, %cst_45 [0] : vector<32x128xf32> to vector<128xf32>
    %132 = vector.shape_cast %131 : vector<128xf32> to vector<1x128xf32>
    %cst_46 = arith.constant 3.200000e+01 : f32
    %133 = vector.broadcast %cst_46 : f32 to vector<1x128xf32>
    %134 = arith.divf %132, %133 : vector<1x128xf32>
    %135 = vector.broadcast %134 : vector<1x128xf32> to vector<32x128xf32>
    %136 = arith.subf %130, %135 : vector<32x128xf32>
    %137 = arith.mulf %136, %136 : vector<32x128xf32>
    %cst_47 = arith.constant dense<0.000000e+00> : vector<128xf32>
    %138 = vector.multi_reduction <add>, %137, %cst_47 [0] : vector<32x128xf32> to vector<128xf32>
    %139 = vector.shape_cast %138 : vector<128xf32> to vector<1x128xf32>
    %cst_48 = arith.constant 3.200000e+01 : f32
    %140 = vector.broadcast %cst_48 : f32 to vector<1x128xf32>
    %141 = arith.divf %139, %140 : vector<1x128xf32>
    %142 = vector.broadcast %134 : vector<1x128xf32> to vector<32x128xf32>
    %143 = arith.subf %130, %142 : vector<32x128xf32>
    %cst_49 = arith.constant 9.99999974E-6 : f32
    %144 = vector.broadcast %cst_49 : f32 to vector<1x128xf32>
    %145 = arith.addf %141, %144 : vector<1x128xf32>
    %146 = math.rsqrt %145 : vector<1x128xf32>
    %147 = vector.broadcast %146 : vector<1x128xf32> to vector<32x128xf32>
    %148 = arith.mulf %143, %147 : vector<32x128xf32>
    %c0_50 = arith.constant 0 : index
    %c0_51 = arith.constant 0 : index
    %149 = vector.load %arg10[%c0_50, %c0_51] : memref<32x32xf32, #tpu.memory_space<vmem>>, vector<32x32xf32>
    %cst_52 = arith.constant dense<0.000000e+00> : vector<32x128xf32>
    %150 = tpu.matmul %149, %148, %cst_52 {dimension_numbers = #tpu.dot_dimension_numbers<[1], [0], [0], [1], [0, 0, 1, 1], [], []>} : vector<32x32xf32>, vector<32x128xf32>, vector<32x128xf32> -> vector<32x128xf32>
    %c0_53 = arith.constant 0 : index
    %c0_54 = arith.constant 0 : index
    %151 = vector.load %arg11[%c0_53, %c0_54] : memref<32x1xf32, #tpu.memory_space<vmem>>, vector<32x1xf32>
    %152 = vector.broadcast %151 : vector<32x1xf32> to vector<32x128xf32>
    %153 = arith.addf %150, %152 : vector<32x128xf32>
    %cst_55 = arith.constant 0.000000e+00 : f32
    %154 = vector.broadcast %cst_55 : f32 to vector<32x128xf32>
    %155 = arith.maximumf %153, %154 : vector<32x128xf32>
    %c0_56 = arith.constant 0 : index
    %c0_57 = arith.constant 0 : index
    %156 = vector.load %arg12[%c0_56, %c0_57] : memref<32x32xf32, #tpu.memory_space<vmem>>, vector<32x32xf32>
    %cst_58 = arith.constant dense<0.000000e+00> : vector<32x128xf32>
    %157 = tpu.matmul %156, %155, %cst_58 {dimension_numbers = #tpu.dot_dimension_numbers<[1], [0], [0], [1], [0, 0, 1, 1], [], []>} : vector<32x32xf32>, vector<32x128xf32>, vector<32x128xf32> -> vector<32x128xf32>
    %c0_59 = arith.constant 0 : index
    %c0_60 = arith.constant 0 : index
    %158 = vector.load %arg13[%c0_59, %c0_60] : memref<32x1xf32, #tpu.memory_space<vmem>>, vector<32x1xf32>
    %159 = vector.broadcast %158 : vector<32x1xf32> to vector<32x128xf32>
    %160 = arith.addf %157, %159 : vector<32x128xf32>
    %161 = arith.addf %160, %148 : vector<32x128xf32>
    %cst_61 = arith.constant dense<0.000000e+00> : vector<128xf32>
    %162 = vector.multi_reduction <add>, %161, %cst_61 [0] : vector<32x128xf32> to vector<128xf32>
    %163 = vector.shape_cast %162 : vector<128xf32> to vector<1x128xf32>
    %cst_62 = arith.constant 3.200000e+01 : f32
    %164 = vector.broadcast %cst_62 : f32 to vector<1x128xf32>
    %165 = arith.divf %163, %164 : vector<1x128xf32>
    %166 = vector.broadcast %165 : vector<1x128xf32> to vector<32x128xf32>
    %167 = arith.subf %161, %166 : vector<32x128xf32>
    %168 = arith.mulf %167, %167 : vector<32x128xf32>
    %cst_63 = arith.constant dense<0.000000e+00> : vector<128xf32>
    %169 = vector.multi_reduction <add>, %168, %cst_63 [0] : vector<32x128xf32> to vector<128xf32>
    %170 = vector.shape_cast %169 : vector<128xf32> to vector<1x128xf32>
    %cst_64 = arith.constant 3.200000e+01 : f32
    %171 = vector.broadcast %cst_64 : f32 to vector<1x128xf32>
    %172 = arith.divf %170, %171 : vector<1x128xf32>
    %173 = vector.broadcast %165 : vector<1x128xf32> to vector<32x128xf32>
    %174 = arith.subf %161, %173 : vector<32x128xf32>
    %cst_65 = arith.constant 9.99999974E-6 : f32
    %175 = vector.broadcast %cst_65 : f32 to vector<1x128xf32>
    %176 = arith.addf %172, %175 : vector<1x128xf32>
    %177 = math.rsqrt %176 : vector<1x128xf32>
    %178 = vector.broadcast %177 : vector<1x128xf32> to vector<32x128xf32>
    %179 = arith.mulf %174, %178 : vector<32x128xf32>
    %c0_66 = arith.constant 0 : index
    %c0_67 = arith.constant 0 : index
    %c0_68 = arith.constant 0 : index
    %180 = vector.load %arg14[%c0_66, %c0_67, %c0_68] : memref<1x32x128xf32, #tpu.memory_space<vmem>>, vector<1x32x128xf32>
    %181 = vector.shape_cast %180 : vector<1x32x128xf32> to vector<32x128xf32>
    %182 = vector.shape_cast %179 : vector<32x128xf32> to vector<1x32x128xf32>
    tpu.vector_store %arg14[%c0_66, %c0_67, %c0_68], %182 {strides = array<i32>} : memref<1x32x128xf32, #tpu.memory_space<vmem>>, vector<1x32x128xf32>,
    return
  }
  func.func @transform_0(%arg0: i32) -> (i32, i32, i32) {
    %c0_i32 = arith.constant 0 : i32
    %c0_i32_0 = arith.constant 0 : i32
    %c0_i32_1 = arith.constant 0 : i32
    return %arg0, %c0_i32, %c0_i32_0 : i32, i32, i32
  }
  func.func @transform_1(%arg0: i32) -> (i32, i32, i32) {
    %c0_i32 = arith.constant 0 : i32
    %c0_i32_0 = arith.constant 0 : i32
    %c0_i32_1 = arith.constant 0 : i32
    return %arg0, %c0_i32, %c0_i32_0 : i32, i32, i32
  }
  func.func @transform_2(%arg0: i32) -> (i32, i32) {
    %c0_i32 = arith.constant 0 : i32
    %c0_i32_0 = arith.constant 0 : i32
    %c0_i32_1 = arith.constant 0 : i32
    return %c0_i32, %c0_i32_0 : i32, i32
  }
  func.func @transform_3(%arg0: i32) -> (i32, i32) {
    %c0_i32 = arith.constant 0 : i32
    %c0_i32_0 = arith.constant 0 : i32
    %c0_i32_1 = arith.constant 0 : i32
    return %c0_i32, %c0_i32_0 : i32, i32
  }
  func.func @transform_4(%arg0: i32) -> (i32, i32) {
    %c0_i32 = arith.constant 0 : i32
    %c0_i32_0 = arith.constant 0 : i32
    %c0_i32_1 = arith.constant 0 : i32
    return %c0_i32, %c0_i32_0 : i32, i32
  }
  func.func @transform_5(%arg0: i32) -> (i32, i32) {
    %c0_i32 = arith.constant 0 : i32
    %c0_i32_0 = arith.constant 0 : i32
    %c0_i32_1 = arith.constant 0 : i32
    return %c0_i32, %c0_i32_0 : i32, i32
  }
  func.func @transform_6(%arg0: i32) -> (i32, i32) {
    %c0_i32 = arith.constant 0 : i32
    %c0_i32_0 = arith.constant 0 : i32
    %c0_i32_1 = arith.constant 0 : i32
    return %c0_i32, %c0_i32_0 : i32, i32
  }
  func.func @transform_7(%arg0: i32) -> (i32, i32) {
    %c0_i32 = arith.constant 0 : i32
    %c0_i32_0 = arith.constant 0 : i32
    %c0_i32_1 = arith.constant 0 : i32
    return %c0_i32, %c0_i32_0 : i32, i32
  }
  func.func @transform_8(%arg0: i32) -> (i32, i32) {
    %c0_i32 = arith.constant 0 : i32
    %c0_i32_0 = arith.constant 0 : i32
    %c0_i32_1 = arith.constant 0 : i32
    return %c0_i32, %c0_i32_0 : i32, i32
  }
  func.func @transform_9(%arg0: i32) -> (i32, i32) {
    %c0_i32 = arith.constant 0 : i32
    %c0_i32_0 = arith.constant 0 : i32
    %c0_i32_1 = arith.constant 0 : i32
    return %c0_i32, %c0_i32_0 : i32, i32
  }
  func.func @transform_10(%arg0: i32) -> (i32, i32) {
    %c0_i32 = arith.constant 0 : i32
    %c0_i32_0 = arith.constant 0 : i32
    %c0_i32_1 = arith.constant 0 : i32
    return %c0_i32, %c0_i32_0 : i32, i32
  }
  func.func @transform_11(%arg0: i32) -> (i32, i32) {
    %c0_i32 = arith.constant 0 : i32
    %c0_i32_0 = arith.constant 0 : i32
    %c0_i32_1 = arith.constant 0 : i32
    return %c0_i32, %c0_i32_0 : i32, i32
  }
  func.func @transform_12(%arg0: i32) -> (i32, i32) {
    %c0_i32 = arith.constant 0 : i32
    %c0_i32_0 = arith.constant 0 : i32
    %c0_i32_1 = arith.constant 0 : i32
    return %c0_i32, %c0_i32_0 : i32, i32
  }
  func.func @transform_13(%arg0: i32) -> (i32, i32, i32) {
    %c0_i32 = arith.constant 0 : i32
    %c0_i32_0 = arith.constant 0 : i32
    %c0_i32_1 = arith.constant 0 : i32
    return %arg0, %c0_i32, %c0_i32_0 : i32, i32, i32
  }
}

</mosaic_0001>

<llo_original>
// kernel: tpu_custom_call.1
$region0: #{tpu_custom_call.1}
  #allocation0 [shape = 'u32[]', space=smem, size = 0x4, offset = 0x4, fixed_abs, tag = 'smem constant byte address 0x4 - core index']
  #allocation1 [shape = 'u32[72,128]{1,0:T(1,128)}', space=vmem, size = 0x9000, scoped, tag = 'internal scratch']
  #allocation2 [shape = 'f32[32,128]{1,0:T(8,128)}', space=vmem, size = 0x4000, scoped, tag = 'scratch operand']
  %s0 = inlined_call_operand.vmem [shape: f32[2,32,128], index: 0, kind: input, shape index: {}]
  %s1 = inlined_call_operand.vmem [shape: f32[2,32,128], index: 1, kind: input, shape index: {}]
  %s2 = inlined_call_operand.vmem [shape: f32[128,128], index: 2, kind: input, shape index: {}]
  %s3 = inlined_call_operand.hbm [shape: f32[8,128], index: 3, kind: input, shape index: {}]
  %s4 = inlined_call_operand.hbm [shape: f32[8,128], index: 4, kind: input, shape index: {}]
  %s5 = inlined_call_operand.vmem [shape: f32[96,32], index: 5, kind: input, shape index: {}]
  %s6 = inlined_call_operand.vmem [shape: f32[96,1], index: 6, kind: input, shape index: {}]
  %s7 = inlined_call_operand.vmem [shape: f32[32,32], index: 7, kind: input, shape index: {}]
  %s8 = inlined_call_operand.vmem [shape: f32[32,1], index: 8, kind: input, shape index: {}]
  %s9 = inlined_call_operand.hbm [shape: f32[32,32], index: 9, kind: input, shape index: {}]
  %s10 = inlined_call_operand.vmem [shape: f32[32,1], index: 10, kind: input, shape index: {}]
  %s11 = inlined_call_operand.hbm [shape: f32[32,32], index: 11, kind: input, shape index: {}]
  %s12 = inlined_call_operand.vmem [shape: f32[32,1], index: 12, kind: input, shape index: {}]
  %s13 = inlined_call_operand.hbm [shape: f32[2,32,128], index: 13, kind: output, shape index: {}]
  %s14 = sld [smem:[#allocation0]]
  $region101: #{tpu_custom_call.1} parent=0
    _
  %s16 = ssub.s32 1, %s14
  %s17 = scalar_select 0, %s16, %s14
  $region1: #{tpu_custom_call.1} parent=0
    #allocation3 [shape = 'u8[4096]{0}', space=vmem, size = 0x1000, scoped, tag = 'input window, operand 3, single buffered']
    #allocation4 [shape = 's32[2]{0}', space=sflag, size = 0x8, scoped, tag = 'scoped memory for tpu_custom_call.1']
    #allocation5 [shape = 's32[2]{0}', space=sflag, size = 0x8, scoped, tag = 'scoped memory for tpu_custom_call.1']
    #allocation6 [shape = 'u8[4096]{0}', space=vmem, size = 0x1000, scoped, tag = 'input window, operand 4, single buffered']
    #allocation7 [shape = 's32[1]{0}', space=sflag, size = 0x4, scoped, tag = 'scoped memory for tpu_custom_call.1']
    #allocation8 [shape = 'u8[16384]{0}', space=vmem, size = 0x4000, scoped, tag = 'input window, operand 9, single buffered']
    #allocation9 [shape = 'u8[16384]{0}', space=vmem, size = 0x4000, scoped, tag = 'input window, operand 11, single buffered']
    #allocation10 [shape = 's32[1]{0}', space=sflag, size = 0x4, scoped, tag = 'scoped memory for tpu_custom_call.1']
    #allocation11 [shape = 'u8[32768]{0}', space=vmem, size = 0x8000, scoped, tag = 'output window, operand 0']
    %18 = vsyncpa [#allocation4], 0
    %19 = vsyncpa [#allocation7], 0
    %20 = vsyncpa [#allocation10], 0
    %21 = vsyncpa [#allocation5], 0
    %s22 = scalar_lea.sflag [#allocation5], 1
    %23 = vsyncpa %s22, 0
    loop: start=0, step=1, limit=4
    $region2: #{tpu_custom_call.1} parent=1 // loop_pre_header
      _
    $region3: #{tpu_custom_call.1} parent=1 // loop_header
      %s25 = sphi 0, %s29
      %p26 = scmp.ge.s32.totalorder %s25, 4
      %s35 = sphi 0, %s37
      %s38 = sphi 0, %s35
      %s39 = sphi 0, %s38
      %s55 = sphi 0, %s39
      %s61 = sphi 0, %s63
      %s64 = sphi 0, %s61
      %s65 = sphi 0, %s64
      %s81 = sphi 0, %s65
      %s85 = sphi 0, %s85
      %s87 = sphi 0, %s85
      %s88 = sphi 0, %s87
      %s102 = sphi 0, %s88
      %s106 = sphi 0, %s106
      %s108 = sphi 0, %s106
      %s109 = sphi 0, %s108
      %s123 = sphi 0, %s109
      %s127 = sphi 0, %s127
      %s129 = sphi 0, %s127
      %s130 = sphi 0, %s129
      %s144 = sphi 0, %s130
      %s148 = sphi 0, %s148
      %s150 = sphi 0, %s148
      %s151 = sphi 0, %s150
      %s165 = sphi 0, %s151
      %s169 = sphi 0, %s169
      %s171 = sphi 0, %s169
      %s172 = sphi 0, %s171
      %s186 = sphi 0, %s172
      %s190 = sphi 0, %s190
      %s192 = sphi 0, %s190
      %s193 = sphi 0, %s192
      %s207 = sphi 0, %s193
      %s211 = sphi 0, %s211
      %s213 = sphi 0, %s211
      %s214 = sphi 0, %s213
      %s228 = sphi 0, %s214
      %s232 = sphi 0, %s232
      %s234 = sphi 0, %s232
      %s235 = sphi 0, %s234
      %s249 = sphi 0, %s235
      %s253 = sphi 0, %s253
      %s255 = sphi 0, %s253
      %s256 = sphi 0, %s255
      %s270 = sphi 0, %s256
      %s274 = sphi 0, %s274
      %s276 = sphi 0, %s274
      %s277 = sphi 0, %s276
      %s291 = sphi 0, %s277
      %s295 = sphi 0, %s295
      %s297 = sphi 0, %s295
      %s298 = sphi 0, %s297
      %s312 = sphi 0, %s298
      %s318 = sphi 0, %s320
      %s321 = sphi 0, %s318
      %s322 = sphi 0, %s321
      %s338 = sphi 0, %s322
    $region4: #{tpu_custom_call.1} parent=1 // loop_header_branch
      %28 = sbr.rel (%p26) target = $region8
    $region5: #{tpu_custom_call.1} parent=1 // loop_body
      %s30 = ssub.s32 %s25, 1
      %s31 = ssub.s32 %s25, 2
      %s32 = sadd.s32 %s25, 1
      %s33 = ssub.s32 %s25, %s32
      %p34 = scmp.eq.s32.totalorder %s33, 0
      %s36 = sadd.s32 %s35, 1
      %s37 = scalar_select %p34, %s35, %s36
      %p40 = pneg %p34
      %p41 = scmp.eq.s32.totalorder %s25, 1
      %p42 = por %p40, %p41
      %p43 = scmp.ne.s32.totalorder %s35, %s38
      %p44 = scmp.eq.s32.totalorder %s25, 0
      %p45 = por %p43, %p44
      %p46 = scmp.ne.s32.totalorder %s35, %s38
      %p47 = scmp.eq.s32.totalorder %s30, 1
      %p48 = por %p46, %p47
      %p49 = scmp.ne.s32.totalorder %s38, %s39
      %p50 = scmp.eq.s32.totalorder %s30, 0
      %p51 = por %p49, %p50
      %p52 = scmp.ne.s32.totalorder %s38, %s39
      %p53 = scmp.eq.s32.totalorder %s31, 1
      %p54 = por %p52, %p53
      %p56 = scmp.ne.s32.totalorder %s39, %s55
      %p57 = scmp.eq.s32.totalorder %s31, 0
      %p58 = por %p56, %p57
      %s59 = ssub.s32 %s25, %s32
      %p60 = scmp.eq.s32.totalorder %s59, 0
      %s62 = sadd.s32 %s61, 1
      %s63 = scalar_select %p60, %s61, %s62
      %p66 = pneg %p60
      %p67 = scmp.eq.s32.totalorder %s25, 1
      %p68 = por %p66, %p67
      %p69 = scmp.ne.s32.totalorder %s61, %s64
      %p70 = scmp.eq.s32.totalorder %s25, 0
      %p71 = por %p69, %p70
      %p72 = scmp.ne.s32.totalorder %s61, %s64
      %p73 = scmp.eq.s32.totalorder %s30, 1
      %p74 = por %p72, %p73
      %p75 = scmp.ne.s32.totalorder %s64, %s65
      %p76 = scmp.eq.s32.totalorder %s30, 0
      %p77 = por %p75, %p76
      %p78 = scmp.ne.s32.totalorder %s64, %s65
      %p79 = scmp.eq.s32.totalorder %s31, 1
      %p80 = por %p78, %p79
      %p82 = scmp.ne.s32.totalorder %s65, %s81
      %p83 = scmp.eq.s32.totalorder %s31, 0
      %p84 = por %p82, %p83
      %s86 = sadd.s32 %s85, 1
      %p89 = scmp.eq.s32.totalorder %s25, 1
      %p90 = scmp.ne.s32.totalorder %s85, %s87
      %p91 = scmp.eq.s32.totalorder %s25, 0
      %p92 = por %p90, %p91
      %p93 = scmp.ne.s32.totalorder %s85, %s87
      %p94 = scmp.eq.s32.totalorder %s30, 1
      %p95 = por %p93, %p94
      %p96 = scmp.ne.s32.totalorder %s87, %s88
      %p97 = scmp.eq.s32.totalorder %s30, 0
      %p98 = por %p96, %p97
      %p99 = scmp.ne.s32.totalorder %s87, %s88
      %p100 = scmp.eq.s32.totalorder %s31, 1
      %p101 = por %p99, %p100
      %p103 = scmp.ne.s32.totalorder %s88, %s102
      %p104 = scmp.eq.s32.totalorder %s31, 0
      %p105 = por %p103, %p104
      %s107 = sadd.s32 %s106, 1
      %p110 = scmp.eq.s32.totalorder %s25, 1
      %p111 = scmp.ne.s32.totalorder %s106, %s108
      %p112 = scmp.eq.s32.totalorder %s25, 0
      %p113 = por %p111, %p112
      %p114 = scmp.ne.s32.totalorder %s106, %s108
      %p115 = scmp.eq.s32.totalorder %s30, 1
      %p116 = por %p114, %p115
      %p117 = scmp.ne.s32.totalorder %s108, %s109
      %p118 = scmp.eq.s32.totalorder %s30, 0
      %p119 = por %p117, %p118
      %p120 = scmp.ne.s32.totalorder %s108, %s109
      %p121 = scmp.eq.s32.totalorder %s31, 1
      %p122 = por %p120, %p121
      %p124 = scmp.ne.s32.totalorder %s109, %s123
      %p125 = scmp.eq.s32.totalorder %s31, 0
      %p126 = por %p124, %p125
      %s128 = sadd.s32 %s127, 1
      %p131 = scmp.eq.s32.totalorder %s25, 1
      %p132 = scmp.ne.s32.totalorder %s127, %s129
      %p133 = scmp.eq.s32.totalorder %s25, 0
      %p134 = por %p132, %p133
      %p135 = scmp.ne.s32.totalorder %s127, %s129
      %p136 = scmp.eq.s32.totalorder %s30, 1
      %p137 = por %p135, %p136
      %p138 = scmp.ne.s32.totalorder %s129, %s130
      %p139 = scmp.eq.s32.totalorder %s30, 0
      %p140 = por %p138, %p139
      %p141 = scmp.ne.s32.totalorder %s129, %s130
      %p142 = scmp.eq.s32.totalorder %s31, 1
      %p143 = por %p141, %p142
      %p145 = scmp.ne.s32.totalorder %s130, %s144
      %p146 = scmp.eq.s32.totalorder %s31, 0
      %p147 = por %p145, %p146
      %s149 = sadd.s32 %s148, 1
      %p152 = scmp.eq.s32.totalorder %s25, 1
      %p153 = scmp.ne.s32.totalorder %s148, %s150
      %p154 = scmp.eq.s32.totalorder %s25, 0
      %p155 = por %p153, %p154
      %p156 = scmp.ne.s32.totalorder %s148, %s150
      %p157 = scmp.eq.s32.totalorder %s30, 1
      %p158 = por %p156, %p157
      %p159 = scmp.ne.s32.totalorder %s150, %s151
      %p160 = scmp.eq.s32.totalorder %s30, 0
      %p161 = por %p159, %p160
      %p162 = scmp.ne.s32.totalorder %s150, %s151
      %p163 = scmp.eq.s32.totalorder %s31, 1
      %p164 = por %p162, %p163
      %p166 = scmp.ne.s32.totalorder %s151, %s165
      %p167 = scmp.eq.s32.totalorder %s31, 0
      %p168 = por %p166, %p167
      %s170 = sadd.s32 %s169, 1
      %p173 = scmp.eq.s32.totalorder %s25, 1
      %p174 = scmp.ne.s32.totalorder %s169, %s171
      %p175 = scmp.eq.s32.totalorder %s25, 0
      %p176 = por %p174, %p175
      %p177 = scmp.ne.s32.totalorder %s169, %s171
      %p178 = scmp.eq.s32.totalorder %s30, 1
      %p179 = por %p177, %p178
      %p180 = scmp.ne.s32.totalorder %s171, %s172
      %p181 = scmp.eq.s32.totalorder %s30, 0
      %p182 = por %p180, %p181
      %p183 = scmp.ne.s32.totalorder %s171, %s172
      %p184 = scmp.eq.s32.totalorder %s31, 1
      %p185 = por %p183, %p184
      %p187 = scmp.ne.s32.totalorder %s172, %s186
      %p188 = scmp.eq.s32.totalorder %s31, 0
      %p189 = por %p187, %p188
      %s191 = sadd.s32 %s190, 1
      %p194 = scmp.eq.s32.totalorder %s25, 1
      %p195 = scmp.ne.s32.totalorder %s190, %s192
      %p196 = scmp.eq.s32.totalorder %s25, 0
      %p197 = por %p195, %p196
      %p198 = scmp.ne.s32.totalorder %s190, %s192
      %p199 = scmp.eq.s32.totalorder %s30, 1
      %p200 = por %p198, %p199
      %p201 = scmp.ne.s32.totalorder %s192, %s193
      %p202 = scmp.eq.s32.totalorder %s30, 0
      %p203 = por %p201, %p202
      %p204 = scmp.ne.s32.totalorder %s192, %s193
      %p205 = scmp.eq.s32.totalorder %s31, 1
      %p206 = por %p204, %p205
      %p208 = scmp.ne.s32.totalorder %s193, %s207
      %p209 = scmp.eq.s32.totalorder %s31, 0
      %p210 = por %p208, %p209
      %s212 = sadd.s32 %s211, 1
      %p215 = scmp.eq.s32.totalorder %s25, 1
      %p216 = scmp.ne.s32.totalorder %s211, %s213
      %p217 = scmp.eq.s32.totalorder %s25, 0
      %p218 = por %p216, %p217
      %p219 = scmp.ne.s32.totalorder %s211, %s213
      %p220 = scmp.eq.s32.totalorder %s30, 1
      %p221 = por %p219, %p220
      %p222 = scmp.ne.s32.totalorder %s213, %s214
      %p223 = scmp.eq.s32.totalorder %s30, 0
      %p224 = por %p222, %p223
      %p225 = scmp.ne.s32.totalorder %s213, %s214
      %p226 = scmp.eq.s32.totalorder %s31, 1
      %p227 = por %p225, %p226
      %p229 = scmp.ne.s32.totalorder %s214, %s228
      %p230 = scmp.eq.s32.totalorder %s31, 0
      %p231 = por %p229, %p230
      %s233 = sadd.s32 %s232, 1
      %p236 = scmp.eq.s32.totalorder %s25, 1
      %p237 = scmp.ne.s32.totalorder %s232, %s234
      %p238 = scmp.eq.s32.totalorder %s25, 0
      %p239 = por %p237, %p238
      %p240 = scmp.ne.s32.totalorder %s232, %s234
      %p241 = scmp.eq.s32.totalorder %s30, 1
      %p242 = por %p240, %p241
      %p243 = scmp.ne.s32.totalorder %s234, %s235
      %p244 = scmp.eq.s32.totalorder %s30, 0
      %p245 = por %p243, %p244
      %p246 = scmp.ne.s32.totalorder %s234, %s235
      %p247 = scmp.eq.s32.totalorder %s31, 1
      %p248 = por %p246, %p247
      %p250 = scmp.ne.s32.totalorder %s235, %s249
      %p251 = scmp.eq.s32.totalorder %s31, 0
      %p252 = por %p250, %p251
      %s254 = sadd.s32 %s253, 1
      %p257 = scmp.eq.s32.totalorder %s25, 1
      %p258 = scmp.ne.s32.totalorder %s253, %s255
      %p259 = scmp.eq.s32.totalorder %s25, 0
      %p260 = por %p258, %p259
      %p261 = scmp.ne.s32.totalorder %s253, %s255
      %p262 = scmp.eq.s32.totalorder %s30, 1
      %p263 = por %p261, %p262
      %p264 = scmp.ne.s32.totalorder %s255, %s256
      %p265 = scmp.eq.s32.totalorder %s30, 0
      %p266 = por %p264, %p265
      %p267 = scmp.ne.s32.totalorder %s255, %s256
      %p268 = scmp.eq.s32.totalorder %s31, 1
      %p269 = por %p267, %p268
      %p271 = scmp.ne.s32.totalorder %s256, %s270
      %p272 = scmp.eq.s32.totalorder %s31, 0
      %p273 = por %p271, %p272
      %s275 = sadd.s32 %s274, 1
      %p278 = scmp.eq.s32.totalorder %s25, 1
      %p279 = scmp.ne.s32.totalorder %s274, %s276
      %p280 = scmp.eq.s32.totalorder %s25, 0
      %p281 = por %p279, %p280
      %p282 = scmp.ne.s32.totalorder %s274, %s276
      %p283 = scmp.eq.s32.totalorder %s30, 1
      %p284 = por %p282, %p283
      %p285 = scmp.ne.s32.totalorder %s276, %s277
      %p286 = scmp.eq.s32.totalorder %s30, 0
      %p287 = por %p285, %p286
      %p288 = scmp.ne.s32.totalorder %s276, %s277
      %p289 = scmp.eq.s32.totalorder %s31, 1
      %p290 = por %p288, %p289
      %p292 = scmp.ne.s32.totalorder %s277, %s291
      %p293 = scmp.eq.s32.totalorder %s31, 0
      %p294 = por %p292, %p293
      %s296 = sadd.s32 %s295, 1
      %p299 = scmp.eq.s32.totalorder %s25, 1
      %p300 = scmp.ne.s32.totalorder %s295, %s297
      %p301 = scmp.eq.s32.totalorder %s25, 0
      %p302 = por %p300, %p301
      %p303 = scmp.ne.s32.totalorder %s295, %s297
      %p304 = scmp.eq.s32.totalorder %s30, 1
      %p305 = por %p303, %p304
      %p306 = scmp.ne.s32.totalorder %s297, %s298
      %p307 = scmp.eq.s32.totalorder %s30, 0
      %p308 = por %p306, %p307
      %p309 = scmp.ne.s32.totalorder %s297, %s298
      %p310 = scmp.eq.s32.totalorder %s31, 1
      %p311 = por %p309, %p310
      %p313 = scmp.ne.s32.totalorder %s298, %s312
      %p314 = scmp.eq.s32.totalorder %s31, 0
      %p315 = por %p313, %p314
      %s316 = ssub.s32 %s25, %s32
      %p317 = scmp.eq.s32.totalorder %s316, 0
      %s319 = sadd.s32 %s318, 1
      %s320 = scalar_select %p317, %s318, %s319
      %p323 = pneg %p317
      %p324 = scmp.eq.s32.totalorder %s25, 1
      %p325 = por %p323, %p324
      %p326 = scmp.ne.s32.totalorder %s318, %s321
      %p327 = scmp.eq.s32.totalorder %s25, 0
      %p328 = por %p326, %p327
      %p329 = scmp.ne.s32.totalorder %s318, %s321
      %p330 = scmp.eq.s32.totalorder %s30, 1
      %p331 = por %p329, %p330
      %p332 = scmp.ne.s32.totalorder %s321, %s322
      %p333 = scmp.eq.s32.totalorder %s30, 0
      %p334 = por %p332, %p333
      %p335 = scmp.ne.s32.totalorder %s321, %s322
      %p336 = scmp.eq.s32.totalorder %s31, 1
      %p337 = por %p335, %p336
      %p339 = scmp.ne.s32.totalorder %s322, %s338
      %p340 = scmp.eq.s32.totalorder %s31, 0
      %p341 = por %p339, %p340
      %p342 = scmp.le.s32.totalorder 1, %s25
      %p343 = scmp.lt.s32.totalorder %s25, 3
      %p344 = pnand %p342, %p343
      %p345 = pneg %p344
      // Predicated region
      $region9: #{tpu_custom_call.1} parent=5 // pred_check
        _
      $region10: #{tpu_custom_call.1} parent=5 // pred_check_branch
        %347 = sbr.rel (%p344) target = $region12
      $region11: #{tpu_custom_call.1} parent=5 // pred_region
        %s348 = ssub.s32 %s25, 1
        // Predicated region
        $region13: #{tpu_custom_call.1} parent=11 // pred_check
          %p349 = pneg %p98
        $region14: #{tpu_custom_call.1} parent=11 // pred_check_branch
          %351 = sbr.rel (%p349) target = $region16
        $region15: #{tpu_custom_call.1} parent=11 // pred_region
          _
        $region16: #{tpu_custom_call.1} parent=11 // pred_fallthru
          _
        // Predicated region
        $region17: #{tpu_custom_call.1} parent=11 // pred_check
          %p352 = pneg %p119
        $region18: #{tpu_custom_call.1} parent=11 // pred_check_branch
          %354 = sbr.rel (%p352) target = $region20
        $region19: #{tpu_custom_call.1} parent=11 // pred_region
          %356 = vsyncadd [#allocation4], 0
          %s358 = sshll.u32 %s3, 4
          %s359 = int_to_ptr.hbm [resolvable:$true] %s358
          %s360 = sshll.u32 [#allocation3], 4
          %s361 = int_to_ptr.vmem [resolvable:$true] %s360
          %363 = dma.hbm_to_vmem [thread:$0]  %s359, 128, %s361, [#allocation4]
        $region20: #{tpu_custom_call.1} parent=11 // pred_fallthru
          _
        // Predicated region
        $region21: #{tpu_custom_call.1} parent=11 // pred_check
          %p364 = pneg %p140
        $region22: #{tpu_custom_call.1} parent=11 // pred_check_branch
          %366 = sbr.rel (%p364) target = $region24
        $region23: #{tpu_custom_call.1} parent=11 // pred_region
          %368 = vsyncadd [#allocation7], 0
          %s370 = sshll.u32 %s4, 4
          %s371 = int_to_ptr.hbm [resolvable:$true] %s370
          %s372 = sshll.u32 [#allocation6], 4
          %s373 = int_to_ptr.vmem [resolvable:$true] %s372
          %375 = dma.hbm_to_vmem [thread:$0]  %s371, 128, %s373, [#allocation7]
        $region24: #{tpu_custom_call.1} parent=11 // pred_fallthru
          _
        // Predicated region
        $region25: #{tpu_custom_call.1} parent=11 // pred_check
          %p376 = pneg %p161
        $region26: #{tpu_custom_call.1} parent=11 // pred_check_branch
          %378 = sbr.rel (%p376) target = $region28
        $region27: #{tpu_custom_call.1} parent=11 // pred_region
          _
        $region28: #{tpu_custom_call.1} parent=11 // pred_fallthru
          _
        // Predicated region
        $region29: #{tpu_custom_call.1} parent=11 // pred_check
          %p379 = pneg %p182
        $region30: #{tpu_custom_call.1} parent=11 // pred_check_branch
          %381 = sbr.rel (%p379) target = $region32
        $region31: #{tpu_custom_call.1} parent=11 // pred_region
          _
        $region32: #{tpu_custom_call.1} parent=11 // pred_fallthru
          _
        // Predicated region
        $region33: #{tpu_custom_call.1} parent=11 // pred_check
          %p382 = pneg %p203
        $region34: #{tpu_custom_call.1} parent=11 // pred_check_branch
          %384 = sbr.rel (%p382) target = $region36
        $region35: #{tpu_custom_call.1} parent=11 // pred_region
          _
        $region36: #{tpu_custom_call.1} parent=11 // pred_fallthru
          _
        // Predicated region
        $region37: #{tpu_custom_call.1} parent=11 // pred_check
          %p385 = pneg %p224
        $region38: #{tpu_custom_call.1} parent=11 // pred_check_branch
          %387 = sbr.rel (%p385) target = $region40
        $region39: #{tpu_custom_call.1} parent=11 // pred_region
          _
        $region40: #{tpu_custom_call.1} parent=11 // pred_fallthru
          _
        // Predicated region
        $region41: #{tpu_custom_call.1} parent=11 // pred_check
          %p388 = pneg %p245
        $region42: #{tpu_custom_call.1} parent=11 // pred_check_branch
          %390 = sbr.rel (%p388) target = $region44
        $region43: #{tpu_custom_call.1} parent=11 // pred_region
          %392 = vsyncadd [#allocation7], 0
          %s393 = sshll.u32 %s9, 4
          %s394 = int_to_ptr.hbm [resolvable:$true] %s393
          %s395 = sshll.u32 [#allocation8], 4
          %s396 = int_to_ptr.vmem [resolvable:$true] %s395
          %401 = dma.hbm_to_vmem [thread:$0]  %s394, 512, %s396, [#allocation7], 128, 128, 8
        $region44: #{tpu_custom_call.1} parent=11 // pred_fallthru
          _
        // Predicated region
        $region45: #{tpu_custom_call.1} parent=11 // pred_check
          %p402 = pneg %p266
        $region46: #{tpu_custom_call.1} parent=11 // pred_check_branch
          %404 = sbr.rel (%p402) target = $region48
        $region47: #{tpu_custom_call.1} parent=11 // pred_region
          _
        $region48: #{tpu_custom_call.1} parent=11 // pred_fallthru
          _
        // Predicated region
        $region49: #{tpu_custom_call.1} parent=11 // pred_check
          %p405 = pneg %p287
        $region50: #{tpu_custom_call.1} parent=11 // pred_check_branch
          %407 = sbr.rel (%p405) target = $region52
        $region51: #{tpu_custom_call.1} parent=11 // pred_region
          %409 = vsyncadd [#allocation10], 0
          %s410 = sshll.u32 %s11, 4
          %s411 = int_to_ptr.hbm [resolvable:$true] %s410
          %s412 = sshll.u32 [#allocation9], 4
          %s413 = int_to_ptr.vmem [resolvable:$true] %s412
          %418 = dma.hbm_to_vmem [thread:$0]  %s411, 512, %s413, [#allocation10], 128, 128, 8
        $region52: #{tpu_custom_call.1} parent=11 // pred_fallthru
          _
        // Predicated region
        $region53: #{tpu_custom_call.1} parent=11 // pred_check
          %p419 = pneg %p308
        $region54: #{tpu_custom_call.1} parent=11 // pred_check_branch
          %421 = sbr.rel (%p419) target = $region56
        $region55: #{tpu_custom_call.1} parent=11 // pred_region
          _
        $region56: #{tpu_custom_call.1} parent=11 // pred_fallthru
          _
      $region12: #{tpu_custom_call.1} parent=5 // pred_fallthru
        _
      %p422 = scmp.lt.s32.totalorder %s25, 2
      // Predicated region
      $region57: #{tpu_custom_call.1} parent=5 // pred_check
        %p423 = pneg %p422
      $region58: #{tpu_custom_call.1} parent=5 // pred_check_branch
        %425 = sbr.rel (%p423) target = $region60
      $region59: #{tpu_custom_call.1} parent=5 // pred_region
        // Predicated region
        $region61: #{tpu_custom_call.1} parent=59 // pred_check
          %p426 = pneg %p45
        $region62: #{tpu_custom_call.1} parent=59 // pred_check_branch
          %428 = sbr.rel (%p426) target = $region64
        $region63: #{tpu_custom_call.1} parent=59 // pred_region
          %p429 = scmp.lt.s32.totalorder %s25, 1
          %s430 = scalar_select %p429, %s25, 1
          %s431 = smul.addr %s430, 4
          %s432 = smul.addr %s431, 8
          %s433 = scalar_lea.vmem %s0, %s432
        $region64: #{tpu_custom_call.1} parent=59 // pred_fallthru
          _
        // Predicated region
        $region65: #{tpu_custom_call.1} parent=59 // pred_check
          %p434 = pneg %p71
        $region66: #{tpu_custom_call.1} parent=59 // pred_check_branch
          %436 = sbr.rel (%p434) target = $region68
        $region67: #{tpu_custom_call.1} parent=59 // pred_region
          %p437 = scmp.lt.s32.totalorder %s25, 1
          %s438 = scalar_select %p437, %s25, 1
          %s439 = smul.addr %s438, 4
          %s440 = smul.addr %s439, 8
          %s441 = scalar_lea.vmem %s1, %s440
        $region68: #{tpu_custom_call.1} parent=59 // pred_fallthru
          _
      $region60: #{tpu_custom_call.1} parent=5 // pred_fallthru
        _
      %p442 = scmp.le.s32.totalorder 1, %s25
      %p443 = scmp.lt.s32.totalorder %s25, 3
      %p444 = pnand %p442, %p443
      %p445 = pneg %p444
      // Predicated region
      $region69: #{tpu_custom_call.1} parent=5 // pred_check
        _
      $region70: #{tpu_custom_call.1} parent=5 // pred_check_branch
        %447 = sbr.rel (%p444) target = $region72
      $region71: #{tpu_custom_call.1} parent=5 // pred_region
        %s448 = ssub.s32 %s25, 1
        // Predicated region
        $region73: #{tpu_custom_call.1} parent=71 // pred_check
          %p449 = pneg %p119
        $region74: #{tpu_custom_call.1} parent=71 // pred_check_branch
          %451 = sbr.rel (%p449) target = $region76
        $region75: #{tpu_custom_call.1} parent=71 // pred_region
          %453 = dma.done [#allocation4], 128
        $region76: #{tpu_custom_call.1} parent=71 // pred_fallthru
          _
        // Predicated region
        $region77: #{tpu_custom_call.1} parent=71 // pred_check
          %p454 = pneg %p140
        $region78: #{tpu_custom_call.1} parent=71 // pred_check_branch
          %456 = sbr.rel (%p454) target = $region80
        $region79: #{tpu_custom_call.1} parent=71 // pred_region
          %458 = dma.done [#allocation7], 128
        $region80: #{tpu_custom_call.1} parent=71 // pred_fallthru
          _
        // Predicated region
        $region81: #{tpu_custom_call.1} parent=71 // pred_check
          %p459 = pneg %p245
        $region82: #{tpu_custom_call.1} parent=71 // pred_check_branch
          %461 = sbr.rel (%p459) target = $region84
        $region83: #{tpu_custom_call.1} parent=71 // pred_region
          %463 = dma.done [#allocation7], 512
        $region84: #{tpu_custom_call.1} parent=71 // pred_fallthru
          _
        // Predicated region
        $region85: #{tpu_custom_call.1} parent=71 // pred_check
          %p464 = pneg %p287
        $region86: #{tpu_custom_call.1} parent=71 // pred_check_branch
          %466 = sbr.rel (%p464) target = $region88
        $region87: #{tpu_custom_call.1} parent=71 // pred_region
          %468 = dma.done [#allocation10], 512
        $region88: #{tpu_custom_call.1} parent=71 // pred_fallthru
          _
        %p469 = scmp.lt.s32.totalorder %s30, 1
        %s470 = scalar_select %p469, %s30, 1
        %s471 = smul.addr %s470, 4
        %s472 = smul.addr %s471, 8
        %s473 = scalar_lea.vmem %s0, %s472
        %p474 = pneg %p51
        %p475 = pneg %p48
        %p476 = scmp.lt.s32.totalorder %s30, 1
        %s477 = scalar_select %p476, %s30, 1
        %s478 = smul.addr %s477, 4
        %s479 = smul.addr %s478, 8
        %s480 = scalar_lea.vmem %s1, %s479
        %p481 = pneg %p77
        %p482 = pneg %p74
        %p483 = pneg %p98
        %p484 = pneg %p95
        %p485 = pneg %p119
        %p486 = pneg %p116
        %p487 = pneg %p140
        %p488 = pneg %p137
        %p489 = pneg %p161
        %p490 = pneg %p158
        %p491 = pneg %p182
        %p492 = pneg %p179
        %p493 = pneg %p203
        %p494 = pneg %p200
        %p495 = pneg %p224
        %p496 = pneg %p221
        %p497 = pneg %p245
        %p498 = pneg %p242
        %p499 = pneg %p266
        %p500 = pneg %p263
        %p501 = pneg %p287
        %p502 = pneg %p284
        %p503 = pneg %p308
        %p504 = pneg %p305
        %p505 = pneg %p334
        %p506 = pneg %p331
        %s507 = sand.u32 %s321, 1
        %s508 = scalar_lea.sflag [#allocation5], %s507
        %s509 = sand.u32 %s321, 1
        %s510 = smul.addr %s509, 32
        %s511 = scalar_lea.vmem [#allocation11], %s510
        %p512 = scmp.lt.s32.totalorder %s30, 1
        %s513 = scalar_select %p512, %s30, 1
        %s514 = smul.addr %s513, 4
        %s515 = smul.addr %s514, 8
        %s516 = scalar_lea.vmem %s0, %s515
        %p517 = scmp.lt.s32.totalorder %s30, 1
        %s518 = scalar_select %p517, %s30, 1
        %s519 = smul.addr %s518, 4
        %s520 = smul.addr %s519, 8
        %s521 = scalar_lea.vmem %s1, %s520
        %v522 = vld [vmem:[%s516] sm:$0xff]
        %v523 = vld [vmem:[%s516 + $0x8] sm:$0xff]
        %v524 = vld [vmem:[%s516 + $0x10] sm:$0xff]
        %v525 = vld [vmem:[%s516 + $0x18] sm:$0xff]
        %v526 = vld [vmem:[%s521] sm:$0xff]
        %v527 = vld [vmem:[%s521 + $0x8] sm:$0xff]
        %v528 = vld [vmem:[%s521 + $0x10] sm:$0xff]
        %v529 = vld [vmem:[%s521 + $0x18] sm:$0xff]
        %v530 = vadd.f32 %v522, %v526
        %v531 = vadd.f32 %v523, %v527
        %v532 = vadd.f32 %v524, %v528
        %v533 = vadd.f32 %v525, %v529
        %v534 = vld [vmem:[%s5] sm:$0xff]
        %v535 = vld [vmem:[%s5 + $0x8] sm:$0xff]
        %v536 = vld [vmem:[%s5 + $0x10] sm:$0xff]
        %v537 = vld [vmem:[%s5 + $0x18] sm:$0xff]
        %v538 = vld [vmem:[%s5 + $0x20] sm:$0xff]
        %v539 = vld [vmem:[%s5 + $0x28] sm:$0xff]
        %v540 = vld [vmem:[%s5 + $0x30] sm:$0xff]
        %v541 = vld [vmem:[%s5 + $0x38] sm:$0xff]
        %v542 = vld [vmem:[%s5 + $0x40] sm:$0xff]
        %v543 = vld [vmem:[%s5 + $0x48] sm:$0xff]
        %v544 = vld [vmem:[%s5 + $0x50] sm:$0xff]
        %v545 = vld [vmem:[%s5 + $0x58] sm:$0xff]
        %v546 = vld [vmem:[%s6] sm:$0xff]
        %v547 = vld [vmem:[%s6 + $0x8] sm:$0xff]
        %v548 = vld [vmem:[%s6 + $0x10] sm:$0xff]
        %v549 = vld [vmem:[%s6 + $0x18] sm:$0xff]
        %v550 = vld [vmem:[%s6 + $0x20] sm:$0xff]
        %v551 = vld [vmem:[%s6 + $0x28] sm:$0xff]
        %v552 = vld [vmem:[%s6 + $0x30] sm:$0xff]
        %v553 = vld [vmem:[%s6 + $0x38] sm:$0xff]
        %v554 = vld [vmem:[%s6 + $0x40] sm:$0xff]
        %v555 = vld [vmem:[%s6 + $0x48] sm:$0xff]
        %v556 = vld [vmem:[%s6 + $0x50] sm:$0xff]
        %v557 = vld [vmem:[%s6 + $0x58] sm:$0xff]
        %559 = vset.pattern.permute.xlu0 0
        %560 = vperm.xlu0 %559, %v546
        %v561 = vpop.permute.xlu0 %560
        %564 = vset.pattern.permute.xlu0 0
        %565 = vperm.xlu0 %564, %v547
        %v566 = vpop.permute.xlu0 %565
        %569 = vset.pattern.permute.xlu0 0
        %570 = vperm.xlu0 %569, %v548
        %v571 = vpop.permute.xlu0 %570
        %574 = vset.pattern.permute.xlu0 0
        %575 = vperm.xlu0 %574, %v549
        %v576 = vpop.permute.xlu0 %575
        %579 = vset.pattern.permute.xlu0 0
        %580 = vperm.xlu0 %579, %v550
        %v581 = vpop.permute.xlu0 %580
        %584 = vset.pattern.permute.xlu0 0
        %585 = vperm.xlu0 %584, %v551
        %v586 = vpop.permute.xlu0 %585
        %589 = vset.pattern.permute.xlu0 0
        %590 = vperm.xlu0 %589, %v552
        %v591 = vpop.permute.xlu0 %590
        %594 = vset.pattern.permute.xlu0 0
        %595 = vperm.xlu0 %594, %v553
        %v596 = vpop.permute.xlu0 %595
        %599 = vset.pattern.permute.xlu0 0
        %600 = vperm.xlu0 %599, %v554
        %v601 = vpop.permute.xlu0 %600
        %604 = vset.pattern.permute.xlu0 0
        %605 = vperm.xlu0 %604, %v555
        %v606 = vpop.permute.xlu0 %605
        %609 = vset.pattern.permute.xlu0 0
        %610 = vperm.xlu0 %609, %v556
        %v611 = vpop.permute.xlu0 %610
        %614 = vset.pattern.permute.xlu0 0
        %615 = vperm.xlu0 %614, %v557
        %v616 = vpop.permute.xlu0 %615
        %vm618 = vcmask 261120
        %v620 = vsel %vm618, %v534, 0
        %v623 = vsel %vm618, %v535, 0
        %v626 = vsel %vm618, %v536, 0
        %v629 = vsel %vm618, %v537, 0
        %v632 = vsel %vm618, %v538, 0
        %v635 = vsel %vm618, %v539, 0
        %v638 = vsel %vm618, %v540, 0
        %v641 = vsel %vm618, %v541, 0
        %v644 = vsel %vm618, %v542, 0
        %v647 = vsel %vm618, %v543, 0
        %v650 = vsel %vm618, %v544, 0
        %v653 = vsel %vm618, %v545, 0
        %655 = vmatpush.msra.mxu0 0.0
        %656 = vmatpush.msra.mxu0 0.0
        %657 = vmatpush.msra.mxu0 0.0
        %658 = vmatpush.msra.mxu0 0.0
        %659 = vmatpush.msra.mxu0 0.0
        %660 = vmatpush.msra.mxu0 0.0
        %661 = vmatpush.msra.mxu0 0.0
        %662 = vmatpush.msra.mxu0 0.0
        %663 = vmatpush.msra.mxu0 0.0
        %664 = vmatpush.msra.mxu0 0.0
        %665 = vmatpush.msra.mxu0 0.0
        %666 = vmatpush.msra.mxu0 0.0
        %667 = vmatpush.msra.mxu0 %v533
        %668 = vmatpush.msra.mxu0 %v532
        %669 = vmatpush.msra.mxu0 %v531
        %670 = vmatpush.msra.mxu0 %v530
        %671 = vmatmul.f32.gmra.mxu0 %v620
        %v672 = vpop.f32.mrf.mxu0
        %v673 = vadd.f32 %v561, %v672
        %674 = vmatmul.f32.gmra.mxu0 %v623
        %v675 = vpop.f32.mrf.mxu0
        %v676 = vadd.f32 %v566, %v675
        %677 = vmatmul.f32.gmra.mxu0 %v626
        %v678 = vpop.f32.mrf.mxu0
        %v679 = vadd.f32 %v571, %v678
        %680 = vmatmul.f32.gmra.mxu0 %v629
        %v681 = vpop.f32.mrf.mxu0
        %v682 = vadd.f32 %v576, %v681
        %683 = vmatmul.f32.gmra.mxu0 %v632
        %v684 = vpop.f32.mrf.mxu0
        %v685 = vadd.f32 %v581, %v684
        %686 = vmatmul.f32.gmra.mxu0 %v635
        %v687 = vpop.f32.mrf.mxu0
        %v688 = vadd.f32 %v586, %v687
        %689 = vmatmul.f32.gmra.mxu0 %v638
        %v690 = vpop.f32.mrf.mxu0
        %v691 = vadd.f32 %v591, %v690
        %692 = vmatmul.f32.gmra.mxu0 %v641
        %v693 = vpop.f32.mrf.mxu0
        %v694 = vadd.f32 %v596, %v693
        %695 = vmatmul.f32.gmra.mxu0 %v644
        %v696 = vpop.f32.mrf.mxu0
        %v697 = vadd.f32 %v601, %v696
        %698 = vmatmul.f32.gmra.mxu0 %v647
        %v699 = vpop.f32.mrf.mxu0
        %v700 = vadd.f32 %v606, %v699
        %701 = vmatmul.f32.gmra.mxu0 %v650
        %v702 = vpop.f32.mrf.mxu0
        %v703 = vadd.f32 %v611, %v702
        %704 = vmatmul.f32.gmra.mxu0 %v653
        %v705 = vpop.f32.mrf.mxu0
        %v706 = vadd.f32 %v616, %v705
        %707 = vdwg.mxu0
        %v708 = vld [vmem:[%s2] sm:$0xff]
        %v709 = vld [vmem:[%s2 + $0x8] sm:$0xff]
        %v710 = vld [vmem:[%s2 + $0x10] sm:$0xff]
        %v711 = vld [vmem:[%s2 + $0x18] sm:$0xff]
        %v712 = vld [vmem:[%s2 + $0x20] sm:$0xff]
        %v713 = vld [vmem:[%s2 + $0x28] sm:$0xff]
        %v714 = vld [vmem:[%s2 + $0x30] sm:$0xff]
        %v715 = vld [vmem:[%s2 + $0x38] sm:$0xff]
        %v716 = vld [vmem:[%s2 + $0x40] sm:$0xff]
        %v717 = vld [vmem:[%s2 + $0x48] sm:$0xff]
        %v718 = vld [vmem:[%s2 + $0x50] sm:$0xff]
        %v719 = vld [vmem:[%s2 + $0x58] sm:$0xff]
        %v720 = vld [vmem:[%s2 + $0x60] sm:$0xff]
        %v721 = vld [vmem:[%s2 + $0x68] sm:$0xff]
        %v722 = vld [vmem:[%s2 + $0x70] sm:$0xff]
        %v723 = vld [vmem:[%s2 + $0x78] sm:$0xff]
        %v724 = vld [vmem:[#allocation3] sm:$0xff]
        %v725 = vld [vmem:[#allocation6] sm:$0xff]
        %v730 = vrot.slane %v685, 1
        %v731 = vrot.slane %v685, 2
        %v732 = vrot.slane %v685, 3
        %v733 = vrot.slane %v685, 4
        %v734 = vrot.slane %v685, 5
        %v735 = vrot.slane %v685, 6
        %v736 = vrot.slane %v685, 7
        %v737 = vrot.slane %v688, 1
        %v738 = vrot.slane %v688, 2
        %v739 = vrot.slane %v688, 3
        %v740 = vrot.slane %v688, 4
        %v741 = vrot.slane %v688, 5
        %v742 = vrot.slane %v688, 6
        %v743 = vrot.slane %v688, 7
        %v744 = vrot.slane %v691, 1
        %v745 = vrot.slane %v691, 2
        %v746 = vrot.slane %v691, 3
        %v747 = vrot.slane %v691, 4
        %v748 = vrot.slane %v691, 5
        %v749 = vrot.slane %v691, 6
        %v750 = vrot.slane %v691, 7
        %v751 = vrot.slane %v694, 1
        %v752 = vrot.slane %v694, 2
        %v753 = vrot.slane %v694, 3
        %v754 = vrot.slane %v694, 4
        %v755 = vrot.slane %v694, 5
        %v756 = vrot.slane %v694, 6
        %v757 = vrot.slane %v694, 7
        %v758 = vperm.slane %v685, 0
        %v759 = vperm.slane %v730, 0
        %v760 = vperm.slane %v731, 0
        %v761 = vperm.slane %v732, 0
        %v762 = vperm.slane %v733, 0
        %v763 = vperm.slane %v734, 0
        %v764 = vperm.slane %v735, 0
        %v765 = vperm.slane %v736, 0
        %v766 = vperm.slane %v688, 0
        %v767 = vperm.slane %v737, 0
        %v768 = vperm.slane %v738, 0
        %v769 = vperm.slane %v739, 0
        %v770 = vperm.slane %v740, 0
        %v771 = vperm.slane %v741, 0
        %v772 = vperm.slane %v742, 0
        %v773 = vperm.slane %v743, 0
        %v774 = vperm.slane %v691, 0
        %v775 = vperm.slane %v744, 0
        %v776 = vperm.slane %v745, 0
        %v777 = vperm.slane %v746, 0
        %v778 = vperm.slane %v747, 0
        %v779 = vperm.slane %v748, 0
        %v780 = vperm.slane %v749, 0
        %v781 = vperm.slane %v750, 0
        %v782 = vperm.slane %v694, 0
        %v783 = vperm.slane %v751, 0
        %v784 = vperm.slane %v752, 0
        %v785 = vperm.slane %v753, 0
        %v786 = vperm.slane %v754, 0
        %v787 = vperm.slane %v755, 0
        %v788 = vperm.slane %v756, 0
        %v789 = vperm.slane %v757, 0
        %v822 = vmul.f32 %v758, %v724
        %v823 = vmul.f32 %v759, %v724
        %v824 = vmul.f32 %v760, %v724
        %v825 = vmul.f32 %v761, %v724
        %v826 = vmul.f32 %v762, %v724
        %v827 = vmul.f32 %v763, %v724
        %v828 = vmul.f32 %v764, %v724
        %v829 = vmul.f32 %v765, %v724
        %v830 = vmul.f32 %v766, %v724
        %v831 = vmul.f32 %v767, %v724
        %v832 = vmul.f32 %v768, %v724
        %v833 = vmul.f32 %v769, %v724
        %v834 = vmul.f32 %v770, %v724
        %v835 = vmul.f32 %v771, %v724
        %v836 = vmul.f32 %v772, %v724
        %v837 = vmul.f32 %v773, %v724
        %v838 = vmul.f32 %v774, %v724
        %v839 = vmul.f32 %v775, %v724
        %v840 = vmul.f32 %v776, %v724
        %v841 = vmul.f32 %v777, %v724
        %v842 = vmul.f32 %v778, %v724
        %v843 = vmul.f32 %v779, %v724
        %v844 = vmul.f32 %v780, %v724
        %v845 = vmul.f32 %v781, %v724
        %v846 = vmul.f32 %v782, %v724
        %v847 = vmul.f32 %v783, %v724
        %v848 = vmul.f32 %v784, %v724
        %v849 = vmul.f32 %v785, %v724
        %v850 = vmul.f32 %v786, %v724
        %v851 = vmul.f32 %v787, %v724
        %v852 = vmul.f32 %v788, %v724
        %v853 = vmul.f32 %v789, %v724
        %854 = vmatpush.msra.mxu0 %v723
        %855 = vmatpush.msra.mxu0 %v722
        %856 = vmatpush.msra.mxu0 %v721
        %857 = vmatpush.msra.mxu0 %v720
        %858 = vmatpush.msra.mxu0 %v719
        %859 = vmatpush.msra.mxu0 %v718
        %860 = vmatpush.msra.mxu0 %v717
        %861 = vmatpush.msra.mxu0 %v716
        %862 = vmatpush.msra.mxu0 %v715
        %863 = vmatpush.msra.mxu0 %v714
        %864 = vmatpush.msra.mxu0 %v713
        %865 = vmatpush.msra.mxu0 %v712
        %866 = vmatpush.msra.mxu0 %v711
        %867 = vmatpush.msra.mxu0 %v710
        %868 = vmatpush.msra.mxu0 %v709
        %869 = vmatpush.msra.mxu0 %v708
        %870 = vmatmul.f32.gmra.mxu0 %v822
        %v871 = vpop.f32.mrf.mxu0
        %v872 = vadd.f32 0.0, %v871
        %873 = vmatmul.f32.gmra.mxu0 %v823
        %v874 = vpop.f32.mrf.mxu0
        %v875 = vadd.f32 0.0, %v874
        %876 = vmatmul.f32.gmra.mxu0 %v824
        %v877 = vpop.f32.mrf.mxu0
        %v878 = vadd.f32 0.0, %v877
        %879 = vmatmul.f32.gmra.mxu0 %v825
        %v880 = vpop.f32.mrf.mxu0
        %v881 = vadd.f32 0.0, %v880
        %882 = vmatmul.f32.gmra.mxu0 %v826
        %v883 = vpop.f32.mrf.mxu0
        %v884 = vadd.f32 0.0, %v883
        %885 = vmatmul.f32.gmra.mxu0 %v827
        %v886 = vpop.f32.mrf.mxu0
        %v887 = vadd.f32 0.0, %v886
        %888 = vmatmul.f32.gmra.mxu0 %v828
        %v889 = vpop.f32.mrf.mxu0
        %v890 = vadd.f32 0.0, %v889
        %891 = vmatmul.f32.gmra.mxu0 %v829
        %v892 = vpop.f32.mrf.mxu0
        %v893 = vadd.f32 0.0, %v892
        %894 = vmatmul.f32.gmra.mxu0 %v830
        %v895 = vpop.f32.mrf.mxu0
        %v896 = vadd.f32 0.0, %v895
        %897 = vmatmul.f32.gmra.mxu0 %v831
        %v898 = vpop.f32.mrf.mxu0
        %v899 = vadd.f32 0.0, %v898
        %900 = vmatmul.f32.gmra.mxu0 %v832
        %v901 = vpop.f32.mrf.mxu0
        %v902 = vadd.f32 0.0, %v901
        %903 = vmatmul.f32.gmra.mxu0 %v833
        %v904 = vpop.f32.mrf.mxu0
        %v905 = vadd.f32 0.0, %v904
        %906 = vmatmul.f32.gmra.mxu0 %v834
        %v907 = vpop.f32.mrf.mxu0
        %v908 = vadd.f32 0.0, %v907
        %909 = vmatmul.f32.gmra.mxu0 %v835
        %v910 = vpop.f32.mrf.mxu0
        %v911 = vadd.f32 0.0, %v910
        %912 = vmatmul.f32.gmra.mxu0 %v836
        %v913 = vpop.f32.mrf.mxu0
        %v914 = vadd.f32 0.0, %v913
        %915 = vmatmul.f32.gmra.mxu0 %v837
        %v916 = vpop.f32.mrf.mxu0
        %v917 = vadd.f32 0.0, %v916
        %918 = vmatmul.f32.gmra.mxu0 %v838
        %v919 = vpop.f32.mrf.mxu0
        %v920 = vadd.f32 0.0, %v919
        %921 = vmatmul.f32.gmra.mxu0 %v839
        %v922 = vpop.f32.mrf.mxu0
        %v923 = vadd.f32 0.0, %v922
        %924 = vmatmul.f32.gmra.mxu0 %v840
        %v925 = vpop.f32.mrf.mxu0
        %v926 = vadd.f32 0.0, %v925
        %927 = vmatmul.f32.gmra.mxu0 %v841
        %v928 = vpop.f32.mrf.mxu0
        %v929 = vadd.f32 0.0, %v928
        %930 = vmatmul.f32.gmra.mxu0 %v842
        %v931 = vpop.f32.mrf.mxu0
        %v932 = vadd.f32 0.0, %v931
        %933 = vmatmul.f32.gmra.mxu0 %v843
        %v934 = vpop.f32.mrf.mxu0
        %v935 = vadd.f32 0.0, %v934
        %936 = vmatmul.f32.gmra.mxu0 %v844
        %v937 = vpop.f32.mrf.mxu0
        %v938 = vadd.f32 0.0, %v937
        %939 = vmatmul.f32.gmra.mxu0 %v845
        %v940 = vpop.f32.mrf.mxu0
        %v941 = vadd.f32 0.0, %v940
        %942 = vmatmul.f32.gmra.mxu0 %v846
        %v943 = vpop.f32.mrf.mxu0
        %v944 = vadd.f32 0.0, %v943
        %945 = vmatmul.f32.gmra.mxu0 %v847
        %v946 = vpop.f32.mrf.mxu0
        %v947 = vadd.f32 0.0, %v946
        %948 = vmatmul.f32.gmra.mxu0 %v848
        %v949 = vpop.f32.mrf.mxu0
        %v950 = vadd.f32 0.0, %v949
        %951 = vmatmul.f32.gmra.mxu0 %v849
        %v952 = vpop.f32.mrf.mxu0
        %v953 = vadd.f32 0.0, %v952
        %954 = vmatmul.f32.gmra.mxu0 %v850
        %v955 = vpop.f32.mrf.mxu0
        %v956 = vadd.f32 0.0, %v955
        %957 = vmatmul.f32.gmra.mxu0 %v851
        %v958 = vpop.f32.mrf.mxu0
        %v959 = vadd.f32 0.0, %v958
        %960 = vmatmul.f32.gmra.mxu0 %v852
        %v961 = vpop.f32.mrf.mxu0
        %v962 = vadd.f32 0.0, %v961
        %963 = vmatmul.f32.gmra.mxu0 %v853
        %v964 = vpop.f32.mrf.mxu0
        %v965 = vadd.f32 0.0, %v964
        %966 = vdwg.mxu0
        %v968 = vrot.slane %v724, 1
        %v969 = vrot.slane %v724, 2
        %v970 = vrot.slane %v724, 3
        %v971 = vrot.slane %v724, 4
        %v972 = vrot.slane %v724, 5
        %v973 = vrot.slane %v724, 6
        %v974 = vrot.slane %v724, 7
        %v975 = vperm.slane %v724, 0
        %v976 = vperm.slane %v968, 0
        %v977 = vperm.slane %v969, 0
        %v978 = vperm.slane %v970, 0
        %v979 = vperm.slane %v971, 0
        %v980 = vperm.slane %v972, 0
        %v981 = vperm.slane %v973, 0
        %v982 = vperm.slane %v974, 0
        %v991 = vmul.f32 %v697, %v975
        %v992 = vmul.f32 %v700, %v975
        %v993 = vmul.f32 %v703, %v975
        %v994 = vmul.f32 %v706, %v975
        %v995 = vmul.f32 %v697, %v976
        %v996 = vmul.f32 %v700, %v976
        %v997 = vmul.f32 %v703, %v976
        %v998 = vmul.f32 %v706, %v976
        %v999 = vmul.f32 %v697, %v977
        %v1000 = vmul.f32 %v700, %v977
        %v1001 = vmul.f32 %v703, %v977
        %v1002 = vmul.f32 %v706, %v977
        %v1003 = vmul.f32 %v697, %v978
        %v1004 = vmul.f32 %v700, %v978
        %v1005 = vmul.f32 %v703, %v978
        %v1006 = vmul.f32 %v706, %v978
        %v1007 = vmul.f32 %v697, %v979
        %v1008 = vmul.f32 %v700, %v979
        %v1009 = vmul.f32 %v703, %v979
        %v1010 = vmul.f32 %v706, %v979
        %v1011 = vmul.f32 %v697, %v980
        %v1012 = vmul.f32 %v700, %v980
        %v1013 = vmul.f32 %v703, %v980
        %v1014 = vmul.f32 %v706, %v980
        %v1015 = vmul.f32 %v697, %v981
        %v1016 = vmul.f32 %v700, %v981
        %v1017 = vmul.f32 %v703, %v981
        %v1018 = vmul.f32 %v706, %v981
        %v1019 = vmul.f32 %v697, %v982
        %v1020 = vmul.f32 %v700, %v982
        %v1021 = vmul.f32 %v703, %v982
        %v1022 = vmul.f32 %v706, %v982
        %1023 = vmatpush.msra.mxu0 %v723
        %1024 = vmatpush.msra.mxu0 %v722
        %1025 = vmatpush.msra.mxu0 %v721
        %1026 = vmatpush.msra.mxu0 %v720
        %1027 = vmatpush.msra.mxu0 %v719
        %1028 = vmatpush.msra.mxu0 %v718
        %1029 = vmatpush.msra.mxu0 %v717
        %1030 = vmatpush.msra.mxu0 %v716
        %1031 = vmatpush.msra.mxu0 %v715
        %1032 = vmatpush.msra.mxu0 %v714
        %1033 = vmatpush.msra.mxu0 %v713
        %1034 = vmatpush.msra.mxu0 %v712
        %1035 = vmatpush.msra.mxu0 %v711
        %1036 = vmatpush.msra.mxu0 %v710
        %1037 = vmatpush.msra.mxu0 %v709
        %1038 = vmatpush.msra.mxu0 %v708
        %1039 = vmatmul.f32.gmra.mxu0 %v991
        %v1040 = vpop.f32.mrf.mxu0
        %v1041 = vadd.f32 0.0, %v1040
        %1042 = vmatmul.f32.gmra.mxu0 %v992
        %v1043 = vpop.f32.mrf.mxu0
        %v1044 = vadd.f32 0.0, %v1043
        %1045 = vmatmul.f32.gmra.mxu0 %v993
        %v1046 = vpop.f32.mrf.mxu0
        %v1047 = vadd.f32 0.0, %v1046
        %1048 = vmatmul.f32.gmra.mxu0 %v994
        %v1049 = vpop.f32.mrf.mxu0
        %v1050 = vadd.f32 0.0, %v1049
        %1051 = vmatmul.f32.gmra.mxu0 %v995
        %v1052 = vpop.f32.mrf.mxu0
        %v1053 = vadd.f32 0.0, %v1052
        %1054 = vmatmul.f32.gmra.mxu0 %v996
        %v1055 = vpop.f32.mrf.mxu0
        %v1056 = vadd.f32 0.0, %v1055
        %1057 = vmatmul.f32.gmra.mxu0 %v997
        %v1058 = vpop.f32.mrf.mxu0
        %v1059 = vadd.f32 0.0, %v1058
        %1060 = vmatmul.f32.gmra.mxu0 %v998
        %v1061 = vpop.f32.mrf.mxu0
        %v1062 = vadd.f32 0.0, %v1061
        %1063 = vmatmul.f32.gmra.mxu0 %v999
        %v1064 = vpop.f32.mrf.mxu0
        %v1065 = vadd.f32 0.0, %v1064
        %1066 = vmatmul.f32.gmra.mxu0 %v1000
        %v1067 = vpop.f32.mrf.mxu0
        %v1068 = vadd.f32 0.0, %v1067
        %1069 = vmatmul.f32.gmra.mxu0 %v1001
        %v1070 = vpop.f32.mrf.mxu0
        %v1071 = vadd.f32 0.0, %v1070
        %1072 = vmatmul.f32.gmra.mxu0 %v1002
        %v1073 = vpop.f32.mrf.mxu0
        %v1074 = vadd.f32 0.0, %v1073
        %1075 = vmatmul.f32.gmra.mxu0 %v1003
        %v1076 = vpop.f32.mrf.mxu0
        %v1077 = vadd.f32 0.0, %v1076
        %1078 = vmatmul.f32.gmra.mxu0 %v1004
        %v1079 = vpop.f32.mrf.mxu0
        %v1080 = vadd.f32 0.0, %v1079
        %1081 = vmatmul.f32.gmra.mxu0 %v1005
        %v1082 = vpop.f32.mrf.mxu0
        %v1083 = vadd.f32 0.0, %v1082
        %1084 = vmatmul.f32.gmra.mxu0 %v1006
        %v1085 = vpop.f32.mrf.mxu0
        %v1086 = vadd.f32 0.0, %v1085
        %1087 = vmatmul.f32.gmra.mxu0 %v1007
        %v1088 = vpop.f32.mrf.mxu0
        %v1089 = vadd.f32 0.0, %v1088
        %1090 = vmatmul.f32.gmra.mxu0 %v1008
        %v1091 = vpop.f32.mrf.mxu0
        %v1092 = vadd.f32 0.0, %v1091
        %1093 = vmatmul.f32.gmra.mxu0 %v1009
        %v1094 = vpop.f32.mrf.mxu0
        %v1095 = vadd.f32 0.0, %v1094
        %1096 = vmatmul.f32.gmra.mxu0 %v1010
        %v1097 = vpop.f32.mrf.mxu0
        %v1098 = vadd.f32 0.0, %v1097
        %1099 = vmatmul.f32.gmra.mxu0 %v1011
        %v1100 = vpop.f32.mrf.mxu0
        %v1101 = vadd.f32 0.0, %v1100
        %1102 = vmatmul.f32.gmra.mxu0 %v1012
        %v1103 = vpop.f32.mrf.mxu0
        %v1104 = vadd.f32 0.0, %v1103
        %1105 = vmatmul.f32.gmra.mxu0 %v1013
        %v1106 = vpop.f32.mrf.mxu0
        %v1107 = vadd.f32 0.0, %v1106
        %1108 = vmatmul.f32.gmra.mxu0 %v1014
        %v1109 = vpop.f32.mrf.mxu0
        %v1110 = vadd.f32 0.0, %v1109
        %1111 = vmatmul.f32.gmra.mxu0 %v1015
        %v1112 = vpop.f32.mrf.mxu0
        %v1113 = vadd.f32 0.0, %v1112
        %1114 = vmatmul.f32.gmra.mxu0 %v1016
        %v1115 = vpop.f32.mrf.mxu0
        %v1116 = vadd.f32 0.0, %v1115
        %1117 = vmatmul.f32.gmra.mxu0 %v1017
        %v1118 = vpop.f32.mrf.mxu0
        %v1119 = vadd.f32 0.0, %v1118
        %1120 = vmatmul.f32.gmra.mxu0 %v1018
        %v1121 = vpop.f32.mrf.mxu0
        %v1122 = vadd.f32 0.0, %v1121
        %1123 = vmatmul.f32.gmra.mxu0 %v1019
        %v1124 = vpop.f32.mrf.mxu0
        %v1125 = vadd.f32 0.0, %v1124
        %1126 = vmatmul.f32.gmra.mxu0 %v1020
        %v1127 = vpop.f32.mrf.mxu0
        %v1128 = vadd.f32 0.0, %v1127
        %1129 = vmatmul.f32.gmra.mxu0 %v1021
        %v1130 = vpop.f32.mrf.mxu0
        %v1131 = vadd.f32 0.0, %v1130
        %1132 = vmatmul.f32.gmra.mxu0 %v1022
        %v1133 = vpop.f32.mrf.mxu0
        %v1134 = vadd.f32 0.0, %v1133
        %1135 = vdwg.mxu0
        %v1137 = vrot.slane %v673, 1
        %v1138 = vrot.slane %v673, 2
        %v1139 = vrot.slane %v673, 3
        %v1140 = vrot.slane %v673, 4
        %v1141 = vrot.slane %v673, 5
        %v1142 = vrot.slane %v673, 6
        %v1143 = vrot.slane %v673, 7
        %v1144 = vperm.slane %v673, 0
        %v1145 = vperm.slane %v1137, 0
        %v1146 = vperm.slane %v1138, 0
        %v1147 = vperm.slane %v1139, 0
        %v1148 = vperm.slane %v1140, 0
        %v1149 = vperm.slane %v1141, 0
        %v1150 = vperm.slane %v1142, 0
        %v1151 = vperm.slane %v1143, 0
        %v1160 = vmul.f32 %v872, %v1144
        %v1161 = vmul.f32 %v875, %v1145
        %v1162 = vmul.f32 %v878, %v1146
        %v1163 = vmul.f32 %v881, %v1147
        %v1164 = vmul.f32 %v884, %v1148
        %v1165 = vmul.f32 %v887, %v1149
        %v1166 = vmul.f32 %v890, %v1150
        %v1167 = vmul.f32 %v893, %v1151
        %v1168 = vadd.f32 %v1160, %v1161
        %v1169 = vadd.f32 %v1168, %v1162
        %v1170 = vadd.f32 %v1169, %v1163
        %v1171 = vadd.f32 %v1170, %v1164
        %v1172 = vadd.f32 %v1171, %v1165
        %v1173 = vadd.f32 %v1172, %v1166
        %v1174 = vadd.f32 %v1173, %v1167
        %v1175 = vadd.f32 %v1174, %v725
        %v1176 = vrot.slane %v1175, 4
        %v1177 = vmax.f32 %v1175, %v1176
        %v1178 = vrot.slane %v1177, 2
        %v1179 = vmax.f32 %v1177, %v1178
        %v1180 = vrot.slane %v1179, 1
        %v1181 = vmax.f32 %v1179, %v1180
        %v1182 = vsub.f32 %v1175, %v1181
        %v1183 = vmul.f32 %v1182, 1.442695
        %v1184 = vpow.pop %v1183
        %v1185 = vrot.slane %v1184, 4
        %v1186 = vadd.f32 %v1184, %v1185
        %v1187 = vrot.slane %v1186, 2
        %v1188 = vadd.f32 %v1186, %v1187
        %v1189 = vrot.slane %v1188, 1
        %v1190 = vadd.f32 %v1188, %v1189
        %v1191 = vrcp.pop %v1190
        %v1192 = vmul.f32 %v1184, %v1191
        %v1194 = vrot.slane %v1192, 1
        %v1195 = vrot.slane %v1192, 2
        %v1196 = vrot.slane %v1192, 3
        %v1197 = vrot.slane %v1192, 4
        %v1198 = vrot.slane %v1192, 5
        %v1199 = vrot.slane %v1192, 6
        %v1200 = vrot.slane %v1192, 7
        %v1201 = vperm.slane %v1192, 0
        %v1202 = vperm.slane %v1194, 0
        %v1203 = vperm.slane %v1195, 0
        %v1204 = vperm.slane %v1196, 0
        %v1205 = vperm.slane %v1197, 0
        %v1206 = vperm.slane %v1198, 0
        %v1207 = vperm.slane %v1199, 0
        %v1208 = vperm.slane %v1200, 0
        %v1217 = vmul.f32 %v1041, %v1201
        %v1218 = vmul.f32 %v1053, %v1202
        %v1219 = vmul.f32 %v1065, %v1203
        %v1220 = vmul.f32 %v1077, %v1204
        %v1221 = vmul.f32 %v1089, %v1205
        %v1222 = vmul.f32 %v1101, %v1206
        %v1223 = vmul.f32 %v1113, %v1207
        %v1224 = vmul.f32 %v1125, %v1208
        %v1225 = vadd.f32 %v1217, %v1218
        %v1226 = vadd.f32 %v1225, %v1219
        %v1227 = vadd.f32 %v1226, %v1220
        %v1228 = vadd.f32 %v1227, %v1221
        %v1229 = vadd.f32 %v1228, %v1222
        %v1230 = vadd.f32 %v1229, %v1223
        %v1231 = vadd.f32 %v1230, %v1224
        %1232 = vst [vmem:[#allocation2] sm:$0xff] %v1231
        %v1234 = vrot.slane %v676, 1
        %v1235 = vrot.slane %v676, 2
        %v1236 = vrot.slane %v676, 3
        %v1237 = vrot.slane %v676, 4
        %v1238 = vrot.slane %v676, 5
        %v1239 = vrot.slane %v676, 6
        %v1240 = vrot.slane %v676, 7
        %v1241 = vperm.slane %v676, 0
        %v1242 = vperm.slane %v1234, 0
        %v1243 = vperm.slane %v1235, 0
        %v1244 = vperm.slane %v1236, 0
        %v1245 = vperm.slane %v1237, 0
        %v1246 = vperm.slane %v1238, 0
        %v1247 = vperm.slane %v1239, 0
        %v1248 = vperm.slane %v1240, 0
        %v1257 = vmul.f32 %v896, %v1241
        %v1258 = vmul.f32 %v899, %v1242
        %v1259 = vmul.f32 %v902, %v1243
        %v1260 = vmul.f32 %v905, %v1244
        %v1261 = vmul.f32 %v908, %v1245
        %v1262 = vmul.f32 %v911, %v1246
        %v1263 = vmul.f32 %v914, %v1247
        %v1264 = vmul.f32 %v917, %v1248
        %v1265 = vadd.f32 %v1257, %v1258
        %v1266 = vadd.f32 %v1265, %v1259
        %v1267 = vadd.f32 %v1266, %v1260
        %v1268 = vadd.f32 %v1267, %v1261
        %v1269 = vadd.f32 %v1268, %v1262
        %v1270 = vadd.f32 %v1269, %v1263
        %v1271 = vadd.f32 %v1270, %v1264
        %v1272 = vadd.f32 %v1271, %v725
        %v1273 = vrot.slane %v1272, 4
        %v1274 = vmax.f32 %v1272, %v1273
        %v1275 = vrot.slane %v1274, 2
        %v1276 = vmax.f32 %v1274, %v1275
        %v1277 = vrot.slane %v1276, 1
        %v1278 = vmax.f32 %v1276, %v1277
        %v1279 = vsub.f32 %v1272, %v1278
        %v1280 = vmul.f32 %v1279, 1.442695
        %v1281 = vpow.pop %v1280
        %v1282 = vrot.slane %v1281, 4
        %v1283 = vadd.f32 %v1281, %v1282
        %v1284 = vrot.slane %v1283, 2
        %v1285 = vadd.f32 %v1283, %v1284
        %v1286 = vrot.slane %v1285, 1
        %v1287 = vadd.f32 %v1285, %v1286
        %v1288 = vrcp.pop %v1287
        %v1289 = vmul.f32 %v1281, %v1288
        %v1291 = vrot.slane %v1289, 1
        %v1292 = vrot.slane %v1289, 2
        %v1293 = vrot.slane %v1289, 3
        %v1294 = vrot.slane %v1289, 4
        %v1295 = vrot.slane %v1289, 5
        %v1296 = vrot.slane %v1289, 6
        %v1297 = vrot.slane %v1289, 7
        %v1298 = vperm.slane %v1289, 0
        %v1299 = vperm.slane %v1291, 0
        %v1300 = vperm.slane %v1292, 0
        %v1301 = vperm.slane %v1293, 0
        %v1302 = vperm.slane %v1294, 0
        %v1303 = vperm.slane %v1295, 0
        %v1304 = vperm.slane %v1296, 0
        %v1305 = vperm.slane %v1297, 0
        %v1314 = vmul.f32 %v1044, %v1298
        %v1315 = vmul.f32 %v1056, %v1299
        %v1316 = vmul.f32 %v1068, %v1300
        %v1317 = vmul.f32 %v1080, %v1301
        %v1318 = vmul.f32 %v1092, %v1302
        %v1319 = vmul.f32 %v1104, %v1303
        %v1320 = vmul.f32 %v1116, %v1304
        %v1321 = vmul.f32 %v1128, %v1305
        %v1322 = vadd.f32 %v1314, %v1315
        %v1323 = vadd.f32 %v1322, %v1316
        %v1324 = vadd.f32 %v1323, %v1317
        %v1325 = vadd.f32 %v1324, %v1318
        %v1326 = vadd.f32 %v1325, %v1319
        %v1327 = vadd.f32 %v1326, %v1320
        %v1328 = vadd.f32 %v1327, %v1321
        %1329 = vst [vmem:[#allocation2 + $0x8] sm:$0xff] %v1328
        %v1331 = vrot.slane %v679, 1
        %v1332 = vrot.slane %v679, 2
        %v1333 = vrot.slane %v679, 3
        %v1334 = vrot.slane %v679, 4
        %v1335 = vrot.slane %v679, 5
        %v1336 = vrot.slane %v679, 6
        %v1337 = vrot.slane %v679, 7
        %v1338 = vperm.slane %v679, 0
        %v1339 = vperm.slane %v1331, 0
        %v1340 = vperm.slane %v1332, 0
        %v1341 = vperm.slane %v1333, 0
        %v1342 = vperm.slane %v1334, 0
        %v1343 = vperm.slane %v1335, 0
        %v1344 = vperm.slane %v1336, 0
        %v1345 = vperm.slane %v1337, 0
        %v1354 = vmul.f32 %v920, %v1338
        %v1355 = vmul.f32 %v923, %v1339
        %v1356 = vmul.f32 %v926, %v1340
        %v1357 = vmul.f32 %v929, %v1341
        %v1358 = vmul.f32 %v932, %v1342
        %v1359 = vmul.f32 %v935, %v1343
        %v1360 = vmul.f32 %v938, %v1344
        %v1361 = vmul.f32 %v941, %v1345
        %v1362 = vadd.f32 %v1354, %v1355
        %v1363 = vadd.f32 %v1362, %v1356
        %v1364 = vadd.f32 %v1363, %v1357
        %v1365 = vadd.f32 %v1364, %v1358
        %v1366 = vadd.f32 %v1365, %v1359
        %v1367 = vadd.f32 %v1366, %v1360
        %v1368 = vadd.f32 %v1367, %v1361
        %v1369 = vadd.f32 %v1368, %v725
        %v1370 = vrot.slane %v1369, 4
        %v1371 = vmax.f32 %v1369, %v1370
        %v1372 = vrot.slane %v1371, 2
        %v1373 = vmax.f32 %v1371, %v1372
        %v1374 = vrot.slane %v1373, 1
        %v1375 = vmax.f32 %v1373, %v1374
        %v1376 = vsub.f32 %v1369, %v1375
        %v1377 = vmul.f32 %v1376, 1.442695
        %v1378 = vpow.pop %v1377
        %v1379 = vrot.slane %v1378, 4
        %v1380 = vadd.f32 %v1378, %v1379
        %v1381 = vrot.slane %v1380, 2
        %v1382 = vadd.f32 %v1380, %v1381
        %v1383 = vrot.slane %v1382, 1
        %v1384 = vadd.f32 %v1382, %v1383
        %v1385 = vrcp.pop %v1384
        %v1386 = vmul.f32 %v1378, %v1385
        %v1388 = vrot.slane %v1386, 1
        %v1389 = vrot.slane %v1386, 2
        %v1390 = vrot.slane %v1386, 3
        %v1391 = vrot.slane %v1386, 4
        %v1392 = vrot.slane %v1386, 5
        %v1393 = vrot.slane %v1386, 6
        %v1394 = vrot.slane %v1386, 7
        %v1395 = vperm.slane %v1386, 0
        %v1396 = vperm.slane %v1388, 0
        %v1397 = vperm.slane %v1389, 0
        %v1398 = vperm.slane %v1390, 0
        %v1399 = vperm.slane %v1391, 0
        %v1400 = vperm.slane %v1392, 0
        %v1401 = vperm.slane %v1393, 0
        %v1402 = vperm.slane %v1394, 0
        %v1411 = vmul.f32 %v1047, %v1395
        %v1412 = vmul.f32 %v1059, %v1396
        %v1413 = vmul.f32 %v1071, %v1397
        %v1414 = vmul.f32 %v1083, %v1398
        %v1415 = vmul.f32 %v1095, %v1399
        %v1416 = vmul.f32 %v1107, %v1400
        %v1417 = vmul.f32 %v1119, %v1401
        %v1418 = vmul.f32 %v1131, %v1402
        %v1419 = vadd.f32 %v1411, %v1412
        %v1420 = vadd.f32 %v1419, %v1413
        %v1421 = vadd.f32 %v1420, %v1414
        %v1422 = vadd.f32 %v1421, %v1415
        %v1423 = vadd.f32 %v1422, %v1416
        %v1424 = vadd.f32 %v1423, %v1417
        %v1425 = vadd.f32 %v1424, %v1418
        %1426 = vst [vmem:[#allocation2 + $0x10] sm:$0xff] %v1425
        %v1428 = vrot.slane %v682, 1
        %v1429 = vrot.slane %v682, 2
        %v1430 = vrot.slane %v682, 3
        %v1431 = vrot.slane %v682, 4
        %v1432 = vrot.slane %v682, 5
        %v1433 = vrot.slane %v682, 6
        %v1434 = vrot.slane %v682, 7
        %v1435 = vperm.slane %v682, 0
        %v1436 = vperm.slane %v1428, 0
        %v1437 = vperm.slane %v1429, 0
        %v1438 = vperm.slane %v1430, 0
        %v1439 = vperm.slane %v1431, 0
        %v1440 = vperm.slane %v1432, 0
        %v1441 = vperm.slane %v1433, 0
        %v1442 = vperm.slane %v1434, 0
        %v1451 = vmul.f32 %v944, %v1435
        %v1452 = vmul.f32 %v947, %v1436
        %v1453 = vmul.f32 %v950, %v1437
        %v1454 = vmul.f32 %v953, %v1438
        %v1455 = vmul.f32 %v956, %v1439
        %v1456 = vmul.f32 %v959, %v1440
        %v1457 = vmul.f32 %v962, %v1441
        %v1458 = vmul.f32 %v965, %v1442
        %v1459 = vadd.f32 %v1451, %v1452
        %v1460 = vadd.f32 %v1459, %v1453
        %v1461 = vadd.f32 %v1460, %v1454
        %v1462 = vadd.f32 %v1461, %v1455
        %v1463 = vadd.f32 %v1462, %v1456
        %v1464 = vadd.f32 %v1463, %v1457
        %v1465 = vadd.f32 %v1464, %v1458
        %v1466 = vadd.f32 %v1465, %v725
        %v1467 = vrot.slane %v1466, 4
        %v1468 = vmax.f32 %v1466, %v1467
        %v1469 = vrot.slane %v1468, 2
        %v1470 = vmax.f32 %v1468, %v1469
        %v1471 = vrot.slane %v1470, 1
        %v1472 = vmax.f32 %v1470, %v1471
        %v1473 = vsub.f32 %v1466, %v1472
        %v1474 = vmul.f32 %v1473, 1.442695
        %v1475 = vpow.pop %v1474
        %v1476 = vrot.slane %v1475, 4
        %v1477 = vadd.f32 %v1475, %v1476
        %v1478 = vrot.slane %v1477, 2
        %v1479 = vadd.f32 %v1477, %v1478
        %v1480 = vrot.slane %v1479, 1
        %v1481 = vadd.f32 %v1479, %v1480
        %v1482 = vrcp.pop %v1481
        %v1483 = vmul.f32 %v1475, %v1482
        %v1485 = vrot.slane %v1483, 1
        %v1486 = vrot.slane %v1483, 2
        %v1487 = vrot.slane %v1483, 3
        %v1488 = vrot.slane %v1483, 4
        %v1489 = vrot.slane %v1483, 5
        %v1490 = vrot.slane %v1483, 6
        %v1491 = vrot.slane %v1483, 7
        %v1492 = vperm.slane %v1483, 0
        %v1493 = vperm.slane %v1485, 0
        %v1494 = vperm.slane %v1486, 0
        %v1495 = vperm.slane %v1487, 0
        %v1496 = vperm.slane %v1488, 0
        %v1497 = vperm.slane %v1489, 0
        %v1498 = vperm.slane %v1490, 0
        %v1499 = vperm.slane %v1491, 0
        %v1508 = vmul.f32 %v1050, %v1492
        %v1509 = vmul.f32 %v1062, %v1493
        %v1510 = vmul.f32 %v1074, %v1494
        %v1511 = vmul.f32 %v1086, %v1495
        %v1512 = vmul.f32 %v1098, %v1496
        %v1513 = vmul.f32 %v1110, %v1497
        %v1514 = vmul.f32 %v1122, %v1498
        %v1515 = vmul.f32 %v1134, %v1499
        %v1516 = vadd.f32 %v1508, %v1509
        %v1517 = vadd.f32 %v1516, %v1510
        %v1518 = vadd.f32 %v1517, %v1511
        %v1519 = vadd.f32 %v1518, %v1512
        %v1520 = vadd.f32 %v1519, %v1513
        %v1521 = vadd.f32 %v1520, %v1514
        %v1522 = vadd.f32 %v1521, %v1515
        %1523 = vst [vmem:[#allocation2 + $0x18] sm:$0xff] %v1522
        %v1524 = vld [vmem:[#allocation2] sm:$0xff]
        %v1525 = vld [vmem:[#allocation2 + $0x8] sm:$0xff]
        %v1526 = vld [vmem:[#allocation2 + $0x10] sm:$0xff]
        %v1527 = vld [vmem:[#allocation2 + $0x18] sm:$0xff]
        %v1528 = vld [vmem:[%s7] sm:$0xff]
        %v1529 = vld [vmem:[%s7 + $0x8] sm:$0xff]
        %v1530 = vld [vmem:[%s7 + $0x10] sm:$0xff]
        %v1531 = vld [vmem:[%s7 + $0x18] sm:$0xff]
        %v1532 = vld [vmem:[%s8] sm:$0xff]
        %v1533 = vld [vmem:[%s8 + $0x8] sm:$0xff]
        %v1534 = vld [vmem:[%s8 + $0x10] sm:$0xff]
        %v1535 = vld [vmem:[%s8 + $0x18] sm:$0xff]
        %1537 = vset.pattern.permute.xlu0 0
        %1538 = vperm.xlu0 %1537, %v1532
        %v1539 = vpop.permute.xlu0 %1538
        %1542 = vset.pattern.permute.xlu0 0
        %1543 = vperm.xlu0 %1542, %v1533
        %v1544 = vpop.permute.xlu0 %1543
        %1547 = vset.pattern.permute.xlu0 0
        %1548 = vperm.xlu0 %1547, %v1534
        %v1549 = vpop.permute.xlu0 %1548
        %1552 = vset.pattern.permute.xlu0 0
        %1553 = vperm.xlu0 %1552, %v1535
        %v1554 = vpop.permute.xlu0 %1553
        %v1557 = vsel %vm618, %v1528, 0
        %v1560 = vsel %vm618, %v1529, 0
        %v1563 = vsel %vm618, %v1530, 0
        %v1566 = vsel %vm618, %v1531, 0
        %1568 = vmatpush.msra.mxu0 0.0
        %1569 = vmatpush.msra.mxu0 0.0
        %1570 = vmatpush.msra.mxu0 0.0
        %1571 = vmatpush.msra.mxu0 0.0
        %1572 = vmatpush.msra.mxu0 0.0
        %1573 = vmatpush.msra.mxu0 0.0
        %1574 = vmatpush.msra.mxu0 0.0
        %1575 = vmatpush.msra.mxu0 0.0
        %1576 = vmatpush.msra.mxu0 0.0
        %1577 = vmatpush.msra.mxu0 0.0
        %1578 = vmatpush.msra.mxu0 0.0
        %1579 = vmatpush.msra.mxu0 0.0
        %1580 = vmatpush.msra.mxu0 %v1527
        %1581 = vmatpush.msra.mxu0 %v1526
        %1582 = vmatpush.msra.mxu0 %v1525
        %1583 = vmatpush.msra.mxu0 %v1524
        %1584 = vmatmul.f32.gmra.mxu0 %v1557
        %v1585 = vpop.f32.mrf.mxu0
        %v1586 = vadd.f32 %v1539, %v1585
        %1587 = vmatmul.f32.gmra.mxu0 %v1560
        %v1588 = vpop.f32.mrf.mxu0
        %v1589 = vadd.f32 %v1544, %v1588
        %1590 = vmatmul.f32.gmra.mxu0 %v1563
        %v1591 = vpop.f32.mrf.mxu0
        %v1592 = vadd.f32 %v1549, %v1591
        %1593 = vmatmul.f32.gmra.mxu0 %v1566
        %v1594 = vpop.f32.mrf.mxu0
        %v1595 = vadd.f32 %v1554, %v1594
        %1596 = vdwg.mxu0
        %v1597 = vadd.f32 %v1586, %v530
        %v1598 = vadd.f32 %v1589, %v531
        %v1599 = vadd.f32 %v1592, %v532
        %v1600 = vadd.f32 %v1595, %v533
        %v1601 = vadd.f32 %v1597, %v1598
        %v1602 = vadd.f32 %v1601, %v1599
        %v1603 = vadd.f32 %v1602, %v1600
        %v1604 = vrot.slane %v1603, 4
        %v1605 = vadd.f32 %v1603, %v1604
        %v1606 = vrot.slane %v1605, 2
        %v1607 = vadd.f32 %v1605, %v1606
        %v1608 = vrot.slane %v1607, 1
        %v1609 = vadd.f32 %v1607, %v1608
        %v1610 = vrcp.pop 32.0
        %v1611 = vmul.f32 32.0, %v1610
        %v1612 = vsub.f32 1.0, %v1611
        %v1613 = vmul.f32 %v1610, %v1612
        %v1614 = vadd.f32 %v1610, %v1613
        %vm1615 = vweird.f32 %v1610
        %v1616 = vsel %vm1615, %v1610, %v1614
        %v1617 = vmul.f32 %v1609, %v1616
        %v1618 = vsub.f32 %v1597, %v1617
        %v1619 = vsub.f32 %v1598, %v1617
        %v1620 = vsub.f32 %v1599, %v1617
        %v1621 = vsub.f32 %v1600, %v1617
        %v1622 = vmul.f32 %v1618, %v1618
        %v1623 = vmul.f32 %v1619, %v1619
        %v1624 = vmul.f32 %v1620, %v1620
        %v1625 = vmul.f32 %v1621, %v1621
        %v1626 = vadd.f32 %v1622, %v1623
        %v1627 = vadd.f32 %v1626, %v1624
        %v1628 = vadd.f32 %v1627, %v1625
        %v1629 = vrot.slane %v1628, 4
        %v1630 = vadd.f32 %v1628, %v1629
        %v1631 = vrot.slane %v1630, 2
        %v1632 = vadd.f32 %v1630, %v1631
        %v1633 = vrot.slane %v1632, 1
        %v1634 = vadd.f32 %v1632, %v1633
        %v1635 = vmul.f32 %v1634, %v1616
        %v1636 = vadd.f32 %v1635, 1e-05
        %v1637 = vrsqrt.pop %v1636
        %v1638 = vmul.f32 %v1637, %v1636
        %v1639 = vmul.f32 %v1638, %v1637
        %v1640 = vmul.f32 0.5, %v1639
        %v1641 = vsub.f32 1.5, %v1640
        %v1642 = vmul.f32 %v1637, %v1641
        %vm1643 = vweird.f32 %v1636
        %vm1644 = vweird.f32 %v1637
        %vm1645 = vmor %vm1643, %vm1644
        %v1646 = vsel %vm1645, %v1637, %v1642
        %v1647 = vmul.f32 %v1618, %v1646
        %v1648 = vmul.f32 %v1619, %v1646
        %v1649 = vmul.f32 %v1620, %v1646
        %v1650 = vmul.f32 %v1621, %v1646
        %v1651 = vld [vmem:[#allocation8] sm:$0xff]
        %v1652 = vld [vmem:[#allocation8 + $0x8] sm:$0xff]
        %v1653 = vld [vmem:[#allocation8 + $0x10] sm:$0xff]
        %v1654 = vld [vmem:[#allocation8 + $0x18] sm:$0xff]
        %v1655 = vld [vmem:[%s10] sm:$0xff]
        %v1656 = vld [vmem:[%s10 + $0x8] sm:$0xff]
        %v1657 = vld [vmem:[%s10 + $0x10] sm:$0xff]
        %v1658 = vld [vmem:[%s10 + $0x18] sm:$0xff]
        %1660 = vset.pattern.permute.xlu0 0
        %1661 = vperm.xlu0 %1660, %v1655
        %v1662 = vpop.permute.xlu0 %1661
        %1665 = vset.pattern.permute.xlu0 0
        %1666 = vperm.xlu0 %1665, %v1656
        %v1667 = vpop.permute.xlu0 %1666
        %1670 = vset.pattern.permute.xlu0 0
        %1671 = vperm.xlu0 %1670, %v1657
        %v1672 = vpop.permute.xlu0 %1671
        %1675 = vset.pattern.permute.xlu0 0
        %1676 = vperm.xlu0 %1675, %v1658
        %v1677 = vpop.permute.xlu0 %1676
        %v1680 = vsel %vm618, %v1651, 0
        %v1683 = vsel %vm618, %v1652, 0
        %v1686 = vsel %vm618, %v1653, 0
        %v1689 = vsel %vm618, %v1654, 0
        %1691 = vmatpush.msra.mxu0 0.0
        %1692 = vmatpush.msra.mxu0 0.0
        %1693 = vmatpush.msra.mxu0 0.0
        %1694 = vmatpush.msra.mxu0 0.0
        %1695 = vmatpush.msra.mxu0 0.0
        %1696 = vmatpush.msra.mxu0 0.0
        %1697 = vmatpush.msra.mxu0 0.0
        %1698 = vmatpush.msra.mxu0 0.0
        %1699 = vmatpush.msra.mxu0 0.0
        %1700 = vmatpush.msra.mxu0 0.0
        %1701 = vmatpush.msra.mxu0 0.0
        %1702 = vmatpush.msra.mxu0 0.0
        %1703 = vmatpush.msra.mxu0 %v1650
        %1704 = vmatpush.msra.mxu0 %v1649
        %1705 = vmatpush.msra.mxu0 %v1648
        %1706 = vmatpush.msra.mxu0 %v1647
        %1707 = vmatmul.f32.gmra.mxu0 %v1680
        %v1708 = vpop.f32.mrf.mxu0
        %v1709 = vadd.f32 %v1662, %v1708
        %1710 = vmatmul.f32.gmra.mxu0 %v1683
        %v1711 = vpop.f32.mrf.mxu0
        %v1712 = vadd.f32 %v1667, %v1711
        %1713 = vmatmul.f32.gmra.mxu0 %v1686
        %v1714 = vpop.f32.mrf.mxu0
        %v1715 = vadd.f32 %v1672, %v1714
        %1716 = vmatmul.f32.gmra.mxu0 %v1689
        %v1717 = vpop.f32.mrf.mxu0
        %v1718 = vadd.f32 %v1677, %v1717
        %1719 = vdwg.mxu0
        %v1720 = vmax.f32 %v1709, 0.0
        %v1721 = vmax.f32 %v1712, 0.0
        %v1722 = vmax.f32 %v1715, 0.0
        %v1723 = vmax.f32 %v1718, 0.0
        %v1724 = vld [vmem:[#allocation9] sm:$0xff]
        %v1725 = vld [vmem:[#allocation9 + $0x8] sm:$0xff]
        %v1726 = vld [vmem:[#allocation9 + $0x10] sm:$0xff]
        %v1727 = vld [vmem:[#allocation9 + $0x18] sm:$0xff]
        %v1728 = vld [vmem:[%s12] sm:$0xff]
        %v1729 = vld [vmem:[%s12 + $0x8] sm:$0xff]
        %v1730 = vld [vmem:[%s12 + $0x10] sm:$0xff]
        %v1731 = vld [vmem:[%s12 + $0x18] sm:$0xff]
        %1733 = vset.pattern.permute.xlu0 0
        %1734 = vperm.xlu0 %1733, %v1728
        %v1735 = vpop.permute.xlu0 %1734
        %1738 = vset.pattern.permute.xlu0 0
        %1739 = vperm.xlu0 %1738, %v1729
        %v1740 = vpop.permute.xlu0 %1739
        %1743 = vset.pattern.permute.xlu0 0
        %1744 = vperm.xlu0 %1743, %v1730
        %v1745 = vpop.permute.xlu0 %1744
        %1748 = vset.pattern.permute.xlu0 0
        %1749 = vperm.xlu0 %1748, %v1731
        %v1750 = vpop.permute.xlu0 %1749
        %v1753 = vsel %vm618, %v1724, 0
        %v1756 = vsel %vm618, %v1725, 0
        %v1759 = vsel %vm618, %v1726, 0
        %v1762 = vsel %vm618, %v1727, 0
        %1764 = vmatpush.msra.mxu0 0.0
        %1765 = vmatpush.msra.mxu0 0.0
        %1766 = vmatpush.msra.mxu0 0.0
        %1767 = vmatpush.msra.mxu0 0.0
        %1768 = vmatpush.msra.mxu0 0.0
        %1769 = vmatpush.msra.mxu0 0.0
        %1770 = vmatpush.msra.mxu0 0.0
        %1771 = vmatpush.msra.mxu0 0.0
        %1772 = vmatpush.msra.mxu0 0.0
        %1773 = vmatpush.msra.mxu0 0.0
        %1774 = vmatpush.msra.mxu0 0.0
        %1775 = vmatpush.msra.mxu0 0.0
        %1776 = vmatpush.msra.mxu0 %v1723
        %1777 = vmatpush.msra.mxu0 %v1722
        %1778 = vmatpush.msra.mxu0 %v1721
        %1779 = vmatpush.msra.mxu0 %v1720
        %1780 = vmatmul.f32.gmra.mxu0 %v1753
        %v1781 = vpop.f32.mrf.mxu0
        %v1782 = vadd.f32 %v1735, %v1781
        %1783 = vmatmul.f32.gmra.mxu0 %v1756
        %v1784 = vpop.f32.mrf.mxu0
        %v1785 = vadd.f32 %v1740, %v1784
        %1786 = vmatmul.f32.gmra.mxu0 %v1759
        %v1787 = vpop.f32.mrf.mxu0
        %v1788 = vadd.f32 %v1745, %v1787
        %1789 = vmatmul.f32.gmra.mxu0 %v1762
        %v1790 = vpop.f32.mrf.mxu0
        %v1791 = vadd.f32 %v1750, %v1790
        %1792 = vdwg.mxu0
        %v1793 = vadd.f32 %v1782, %v1647
        %v1794 = vadd.f32 %v1785, %v1648
        %v1795 = vadd.f32 %v1788, %v1649
        %v1796 = vadd.f32 %v1791, %v1650
        %v1797 = vadd.f32 %v1793, %v1794
        %v1798 = vadd.f32 %v1797, %v1795
        %v1799 = vadd.f32 %v1798, %v1796
        %v1800 = vrot.slane %v1799, 4
        %v1801 = vadd.f32 %v1799, %v1800
        %v1802 = vrot.slane %v1801, 2
        %v1803 = vadd.f32 %v1801, %v1802
        %v1804 = vrot.slane %v1803, 1
        %v1805 = vadd.f32 %v1803, %v1804
        %v1806 = vmul.f32 %v1805, %v1616
        %v1807 = vsub.f32 %v1793, %v1806
        %v1808 = vsub.f32 %v1794, %v1806
        %v1809 = vsub.f32 %v1795, %v1806
        %v1810 = vsub.f32 %v1796, %v1806
        %v1811 = vmul.f32 %v1807, %v1807
        %v1812 = vmul.f32 %v1808, %v1808
        %v1813 = vmul.f32 %v1809, %v1809
        %v1814 = vmul.f32 %v1810, %v1810
        %v1815 = vadd.f32 %v1811, %v1812
        %v1816 = vadd.f32 %v1815, %v1813
        %v1817 = vadd.f32 %v1816, %v1814
        %v1818 = vrot.slane %v1817, 4
        %v1819 = vadd.f32 %v1817, %v1818
        %v1820 = vrot.slane %v1819, 2
        %v1821 = vadd.f32 %v1819, %v1820
        %v1822 = vrot.slane %v1821, 1
        %v1823 = vadd.f32 %v1821, %v1822
        %v1824 = vmul.f32 %v1823, %v1616
        %v1825 = vadd.f32 %v1824, 1e-05
        %v1826 = vrsqrt.pop %v1825
        %v1827 = vmul.f32 %v1826, %v1825
        %v1828 = vmul.f32 %v1827, %v1826
        %v1829 = vmul.f32 0.5, %v1828
        %v1830 = vsub.f32 1.5, %v1829
        %v1831 = vmul.f32 %v1826, %v1830
        %vm1832 = vweird.f32 %v1825
        %vm1833 = vweird.f32 %v1826
        %vm1834 = vmor %vm1832, %vm1833
        %v1835 = vsel %vm1834, %v1826, %v1831
        %v1836 = vmul.f32 %v1807, %v1835
        %v1837 = vmul.f32 %v1808, %v1835
        %v1838 = vmul.f32 %v1809, %v1835
        %v1839 = vmul.f32 %v1810, %v1835
        %1840 = vst [vmem:[%s511] sm:$0xff] %v1836
        %1841 = vst [vmem:[%s511 + $0x8] sm:$0xff] %v1837
        %1842 = vst [vmem:[%s511 + $0x10] sm:$0xff] %v1838
        %1843 = vst [vmem:[%s511 + $0x18] sm:$0xff] %v1839
        %s1844 = sand.u32 %s321, 1
        %s1845 = scalar_lea.sflag [#allocation5], %s1844
        %s1846 = sand.u32 %s321, 1
        %s1847 = smul.addr %s1846, 32
        %s1848 = scalar_lea.vmem [#allocation11], %s1847
        // Predicated region
        $region89: #{tpu_custom_call.1} parent=71 // pred_check
          %p1849 = pneg %p331
        $region90: #{tpu_custom_call.1} parent=71 // pred_check_branch
          %1851 = sbr.rel (%p1849) target = $region92
        $region91: #{tpu_custom_call.1} parent=71 // pred_region
          %1853 = vsyncadd %s1845, 0
          %s1854 = smul.addr %s30, 4
          %s1855 = smul.addr %s1854, 8
          %s1856 = scalar_lea.hbm %s13, %s1855
          %s1857 = sshll.u32 %s1848, 4
          %s1858 = int_to_ptr.vmem [resolvable:$true] %s1857
          %s1859 = sshll.u32 %s1856, 4
          %s1860 = int_to_ptr.hbm [resolvable:$true] %s1859
          %1865 = dma.vmem_to_hbm [thread:$0]  %s1858, 512, %s1860, %s1845, 128, 128, 8
        $region92: #{tpu_custom_call.1} parent=71 // pred_fallthru
          _
      $region72: #{tpu_custom_call.1} parent=5 // pred_fallthru
        _
      %p1866 = scmp.le.s32.totalorder 2, %s25
      // Predicated region
      $region93: #{tpu_custom_call.1} parent=5 // pred_check
        %p1867 = pneg %p1866
      $region94: #{tpu_custom_call.1} parent=5 // pred_check_branch
        %1869 = sbr.rel (%p1867) target = $region96
      $region95: #{tpu_custom_call.1} parent=5 // pred_region
        %s1870 = ssub.s32 %s25, 2
        // Predicated region
        $region97: #{tpu_custom_call.1} parent=95 // pred_check
          %p1871 = pneg %p337
        $region98: #{tpu_custom_call.1} parent=95 // pred_check_branch
          %1873 = sbr.rel (%p1871) target = $region100
        $region99: #{tpu_custom_call.1} parent=95 // pred_region
          %s1874 = sand.u32 %s322, 1
          %s1875 = scalar_lea.sflag [#allocation5], %s1874
          %s1876 = sand.u32 %s322, 1
          %s1877 = smul.addr %s1876, 32
          %s1878 = scalar_lea.vmem [#allocation11], %s1877
          %1880 = dma.done %s1875, 512
        $region100: #{tpu_custom_call.1} parent=95 // pred_fallthru
          _
      $region96: #{tpu_custom_call.1} parent=5 // pred_fallthru
        _
    $region6: #{tpu_custom_call.1} parent=1 // loop_footer
      %s29 = sadd.s32 1, %s25
    $region7: #{tpu_custom_call.1} parent=1 // loop_footer_branch
      %24 = sbr.rel target = $region3
    $region8: #{tpu_custom_call.1} parent=1 // loop_exit
      _
    %1881 = vsyncpa [#allocation4], 1
    %s1882 = scalar_lea.sflag [#allocation4], 1
    %1883 = vsyncpa %s1882, 1
    %1884 = vsyncpa [#allocation7], 1
    %1885 = vsyncpa [#allocation10], 1
    %1886 = vsyncpa [#allocation5], 1
    %s1887 = scalar_lea.sflag [#allocation5], 1
    %1888 = vsyncpa %s1887, 1

</llo_original>
